<compile_context>
chip_gen: v7x
topology: tpu7x:2x2x1
jax: 0.10.0
libtpu: 0.0.40
codegen_flags: <defaults>
</compile_context>

<pallas_src>
import math
import functools

import jax
import jax.numpy as jnp
from jax.experimental import pallas as pl
from jax.experimental.pallas import tpu as pltpu


def _choose_q_tile(S, max_tile=256):
    """Largest query tile <= max_tile that divides S and is a multiple of 8."""
    for t in (256, 128, 64, 32, 16, 8):
        if t <= max_tile and t <= S and S % t == 0:
            return t
    return S


# ----------------------------------------------------------------------------
# Pallas kernel: one full Transformer encoder layer for one (batch, q-tile) step.
# ----------------------------------------------------------------------------
def _encoder_layer_kernel(num_heads,
                          xq_ref, xkv_ref, m_ref,
                          wq_ref, bq_ref, wkv_ref, bkv_ref,
                          wo_ref, bo_ref, g1_ref, beta1_ref,
                          w1_ref, bf1_ref, w2_ref, bf2_ref,
                          g2_ref, beta2_ref,
                          o_ref):
    f32 = jnp.float32
    bf16 = jnp.bfloat16

    xq = xq_ref[0].astype(f32)          # (TQ, D)  query rows of this grid step
    xkv = xkv_ref[0].astype(f32)        # (S,  D)  all rows (keys / values)
    m = m_ref[0]                        # (1, S)
    TQ, D = xq.shape
    S = xkv.shape[0]
    H = num_heads
    dk = D // H
    scale = 1.0 / math.sqrt(dk)

    xq_bf = xq.astype(bf16)
    xkv_bf = xkv.astype(bf16)

    # --- projections: bf16 MXU inputs, f32 accumulation ---------------------------
    q = jnp.dot(xq_bf, wq_ref[...], preferred_element_type=f32) + bq_ref[...]      # (TQ, D)
    kv = jnp.dot(xkv_bf, wkv_ref[...], preferred_element_type=f32) + bkv_ref[...]  # (S, 2D)
    k = kv[:, :D]
    v = kv[:, D:]

    q = q * scale                       # fold 1/sqrt(dk) into q once (not per score matrix)

    def to_heads(t):
        # (n, D) -> (H, n, dk): static lane slices stacked along a new major axis.
        return jnp.concatenate([t[None, :, h * dk:(h + 1) * dk] for h in range(H)], axis=0)

    qh = to_heads(q).astype(bf16)       # (H, TQ, dk)
    kh = to_heads(k).astype(bf16)       # (H, S,  dk)
    vh = to_heads(v).astype(bf16)       # (H, S,  dk)

    # --- multi-head attention: batched contractions over all heads at once --------
    scores = jnp.einsum('hqd,hkd->hqk', qh, kh,
                        preferred_element_type=f32)                  # (H, TQ, S)
    bias = jnp.where(m == 0.0, -1000000000.0, 0.0).astype(f32)       # (1, S) additive mask
    scores = scores + bias
    s_max = jnp.max(scores, axis=-1, keepdims=True)
    e = jnp.exp(scores - s_max)
    denom = jnp.sum(e, axis=-1, keepdims=True)
    probs = e * pl.reciprocal(denom, approx=True)                    # EUP, not VALU divide
    ctx = jnp.einsum('hqk,hkd->hqd', probs.astype(bf16), vh,
                     preferred_element_type=f32)                     # (H, TQ, dk)

    ctx2d = jnp.concatenate([ctx[h] for h in range(H)], axis=-1)     # (TQ, D)
    attn_out = jnp.dot(ctx2d.astype(bf16), wo_ref[...],
                       preferred_element_type=f32) + bo_ref[...]

    # --- residual + LayerNorm 1 (dropout = identity) -------------------------------
    h1 = xq + attn_out
    mu1 = jnp.mean(h1, axis=-1, keepdims=True)
    var1 = jnp.mean((h1 - mu1) ** 2, axis=-1, keepdims=True)
    h1n = (h1 - mu1) * jax.lax.rsqrt(var1 + 1e-5) * g1_ref[...] + beta1_ref[...]

    # --- feed forward ---------------------------------------------------------------
    ff = jnp.dot(h1n.astype(bf16), w1_ref[...], preferred_element_type=f32) + bf1_ref[...]
    ff = jnp.maximum(ff, 0.0)
    ff = jnp.dot(ff.astype(bf16), w2_ref[...], preferred_element_type=f32) + bf2_ref[...]

    # --- residual + LayerNorm 2 (dropout = identity) -------------------------------
    h2 = h1n + ff
    mu2 = jnp.mean(h2, axis=-1, keepdims=True)
    var2 = jnp.mean((h2 - mu2) ** 2, axis=-1, keepdims=True)
    out = (h2 - mu2) * jax.lax.rsqrt(var2 + 1e-5) * g2_ref[...] + beta2_ref[...]

    o_ref[0] = out.astype(o_ref.dtype)


def encoder_layer_pallas(x, mask, p, num_heads, q_tile=None):
    """One encoder layer. x: (B, S, D) f32, mask: (B, 1, S)."""
    B, S, D = x.shape
    d_ff = p["w1"].shape[1]
    assert D % num_heads == 0
    TQ = q_tile or _choose_q_tile(S)
    QT = S // TQ
    bf16 = jnp.bfloat16

    # bf16 weights for the MXU (halves VMEM/HBM residency); biases & LN params stay f32.
    wq = p["wq"].astype(bf16)
    wkv = jnp.concatenate([p["wk"], p["wv"]], axis=1).astype(bf16)   # fused K|V projection
    bkv = jnp.concatenate([p["bk"], p["bv"]], axis=1)
    wo = p["wo"].astype(bf16)
    w1 = p["w1"].astype(bf16)
    w2 = p["w2"].astype(bf16)

    def const_spec(shape):
        z = (0,) * len(shape)
        return pl.BlockSpec(shape, lambda b, qi, _z=z: _z)

    # --- explicit VMEM budget (weights are double-buffered by BlockSpec) -----------
    weight_bytes = sum(int(a.size) * a.dtype.itemsize for a in (wq, wkv, wo, w1, w2))
    small_bytes = sum(int(a.size) * a.dtype.itemsize for a in
                      (p["bq"], bkv, p["bo"], p["g1"], p["beta1"],
                       p["b1"], p["b2"], p["g2"], p["beta2"]))
    act_bytes = (TQ * D + S * D + S + TQ * D) * 4
    interm_bytes = 4 * (3 * num_heads * TQ * S + 4 * (TQ + 2 * S) * D + 4 * TQ * max(D, d_ff))
    est = 2 * (weight_bytes + small_bytes + act_bytes) + interm_bytes
    vmem_limit = int(min(max(est, 32 * 1024 * 1024), 64 * 1024 * 1024))  # cap at v7x physical

    # --- advisory cost estimate ------------------------------------------------------
    flops = B * QT * (2 * TQ * D * D          # q projection
                      + 4 * S * D * D         # fused k|v projection (recomputed per q-tile)
                      + 4 * TQ * S * D        # scores + attn@V
                      + 2 * TQ * D * D        # output projection
                      + 4 * TQ * D * d_ff)    # FFN
    transcendentals = B * QT * num_heads * TQ * S
    bytes_accessed = int(weight_bytes + small_bytes
                         + x.size * x.dtype.itemsize * (2 + QT)
                         + mask.size * mask.dtype.itemsize * QT)

    kernel = functools.partial(_encoder_layer_kernel, num_heads)
    return pl.pallas_call(
        kernel,
        out_shape=jax.ShapeDtypeStruct((B, S, D), x.dtype),
        grid=(B, QT),
        in_specs=[
            pl.BlockSpec((1, TQ, D), lambda b, qi: (b, qi, 0)),   # x (query rows)
            pl.BlockSpec((1, S, D),  lambda b, qi: (b, 0, 0)),    # x (key/value rows)
            pl.BlockSpec((1, 1, S),  lambda b, qi: (b, 0, 0)),    # mask
            const_spec((D, D)), const_spec((1, D)),               # wq, bq
            const_spec((D, 2 * D)), const_spec((1, 2 * D)),       # wkv, bkv (fused)
            const_spec((D, D)), const_spec((1, D)),               # wo, bo
            const_spec((1, D)), const_spec((1, D)),               # ln1 gamma, beta
            const_spec((D, d_ff)), const_spec((1, d_ff)),         # ffn w1, b1
            const_spec((d_ff, D)), const_spec((1, D)),            # ffn w2, b2
            const_spec((1, D)), const_spec((1, D)),               # ln2 gamma, beta
        ],
        out_specs=pl.BlockSpec((1, TQ, D), lambda b, qi: (b, qi, 0)),
        compiler_params=pltpu.CompilerParams(
            dimension_semantics=("parallel", "parallel"),
            vmem_limit_bytes=vmem_limit),
        cost_estimate=pl.CostEstimate(flops=int(flops),
                                      transcendentals=int(transcendentals),
                                      bytes_accessed=int(bytes_accessed)),
    )(x, x, mask,
      wq, p["bq"], wkv, bkv, wo, p["bo"], p["g1"], p["beta1"],
      w1, p["b1"], w2, p["b2"], p["g2"], p["beta2"])


# ----------------------------------------------------------------------------
# Glue: embedding, positional encoding, parameter init, full encoder forward.
# ----------------------------------------------------------------------------
def make_positional_encoding(max_len, d_model):
    position = jnp.arange(max_len, dtype=jnp.float32)[:, None]
    div_term = jnp.exp(jnp.arange(0, d_model, 2, dtype=jnp.float32)
                       * (-math.log(10000.0) / d_model))
    pe = jnp.zeros((max_len, d_model), jnp.float32)
    pe = pe.at[:, 0::2].set(jnp.sin(position * div_term))
    pe = pe.at[:, 1::2].set(jnp.cos(position * div_term))
    return pe


def init_params(key, vocab_size, d_model, num_layers, d_ff, max_seq_len):
    keys = jax.random.split(key, 1 + num_layers)
    params = {
        "embedding": jax.random.normal(keys[0], (vocab_size, d_model), jnp.float32) * 0.1,
        "pe": make_positional_encoding(max_seq_len, d_model),
        "layers": [],
    }
    for i in range(num_layers):
        ks = jax.random.split(keys[1 + i], 12)
        lin = lambda k, din, dout: jax.random.normal(k, (din, dout), jnp.float32) * 0.05
        bias = lambda k, d: jax.random.normal(k, (1, d), jnp.float32) * 0.01
        params["layers"].append({
            "wq": lin(ks[0], d_model, d_model), "bq": bias(ks[1], d_model),
            "wk": lin(ks[2], d_model, d_model), "bk": bias(ks[3], d_model),
            "wv": lin(ks[4], d_model, d_model), "bv": bias(ks[5], d_model),
            "wo": lin(ks[6], d_model, d_model), "bo": bias(ks[7], d_model),
            "g1": jnp.ones((1, d_model), jnp.float32),
            "beta1": jnp.zeros((1, d_model), jnp.float32),
            "w1": lin(ks[8], d_model, d_ff), "b1": bias(ks[9], d_ff),
            "w2": lin(ks[10], d_ff, d_model), "b2": bias(ks[11], d_model),
            "g2": jnp.ones((1, d_model), jnp.float32),
            "beta2": jnp.zeros((1, d_model), jnp.float32),
        })
    return params


def encoder_forward(src, src_mask, params, num_heads):
    d_model = params["embedding"].shape[1]
    S = src.shape[1]
    x = jnp.take(params["embedding"], src, axis=0) * math.sqrt(d_model)
    x = x + params["pe"][:S][None, :, :]
    # dropout = identity (eval mode)
    for p in params["layers"]:
        x = encoder_layer_pallas(x, src_mask, p, num_heads)
    return x


# ----------------------------------------------------------------------------
# Pure-JAX reference (verification only).  mm_dtype controls matmul-input precision
# so the kernel's bf16 MXU path can be checked tightly and the full-f32 math loosely.
# ----------------------------------------------------------------------------
def _layer_ref(x, mask, p, num_heads, mm_dtype):
    f32 = jnp.float32
    B, S, D = x.shape
    dk = D // num_heads
    mm = lambda a, w: jnp.dot(a.astype(mm_dtype), w.astype(mm_dtype),
                              preferred_element_type=f32)
    q = (mm(x, p["wq"]) + p["bq"]).reshape(B, S, num_heads, dk).transpose(0, 2, 1, 3)
    k = (mm(x, p["wk"]) + p["bk"]).reshape(B, S, num_heads, dk).transpose(0, 2, 1, 3)
    v = (mm(x, p["wv"]) + p["bv"]).reshape(B, S, num_heads, dk).transpose(0, 2, 1, 3)
    scores = jnp.einsum("bhqd,bhkd->bhqk", q.astype(mm_dtype), k.astype(mm_dtype),
                        preferred_element_type=f32) / math.sqrt(dk)
    scores = jnp.where(mask[:, :, None, :] == 0, -1000000000.0, scores)
    attn = jax.nn.softmax(scores, axis=-1)
    ctx = jnp.einsum("bhqk,bhkd->bhqd", attn.astype(mm_dtype), v.astype(mm_dtype),
                     preferred_element_type=f32)
    ctx = ctx.transpose(0, 2, 1, 3).reshape(B, S, D)
    attn_out = mm(ctx, p["wo"]) + p["bo"]
    h1 = x + attn_out
    mu = jnp.mean(h1, -1, keepdims=True)
    var = jnp.mean((h1 - mu) ** 2, -1, keepdims=True)
    h1n = (h1 - mu) / jnp.sqrt(var + 1e-5) * p["g1"] + p["beta1"]
    ff = jnp.maximum(mm(h1n, p["w1"]) + p["b1"], 0.0)
    ff = mm(ff, p["w2"]) + p["b2"]
    h2 = h1n + ff
    mu2 = jnp.mean(h2, -1, keepdims=True)
    var2 = jnp.mean((h2 - mu2) ** 2, -1, keepdims=True)
    return (h2 - mu2) / jnp.sqrt(var2 + 1e-5) * p["g2"] + p["beta2"]


def encoder_forward_ref(src, src_mask, params, num_heads, mm_dtype=jnp.float32):
    d_model = params["embedding"].shape[1]
    S = src.shape[1]
    x = jnp.take(params["embedding"], src, axis=0) * math.sqrt(d_model)
    x = x + params["pe"][:S][None, :, :]
    for p in params["layers"]:
        x = _layer_ref(x, src_mask, p, num_heads, mm_dtype)
    return x


# ----------------------------------------------------------------------------
if __name__ == "__main__":
    B, S = 2, 8
    vocab_size, d_model, num_layers, num_heads, d_ff, max_seq_len = 50, 32, 2, 4, 64, 16

    key = jax.random.PRNGKey(0)
    k_src, k_params = jax.random.split(key)
    src = jax.random.randint(k_src, (B, S), 0, vocab_size, dtype=jnp.int32)
    # mask out the last two key positions of the second sequence
    src_mask = jnp.ones((B, 1, S), jnp.float32).at[1, 0, 6:].set(0.0)

    params = init_params(k_params, vocab_size, d_model, num_layers, d_ff, max_seq_len)

    out = encoder_forward(src, src_mask, params, num_heads)
    out = jax.block_until_ready(out)
    assert out.shape == (B, S, d_model)

    # Tight check against a precision-matched (bf16 matmul inputs, f32 accumulation) ref,
    # loose sanity check against the pure-f32 PyTorch-equivalent math.
    ref_bf16 = encoder_forward_ref(src, src_mask, params, num_heads, jnp.bfloat16)
    ref_f32 = encoder_forward_ref(src, src_mask, params, num_heads, jnp.float32)
    assert jnp.allclose(out, ref_bf16, atol=2e-2, rtol=2e-2), "mismatch vs bf16-matched ref"
    assert jnp.allclose(out, ref_f32, atol=1e-1, rtol=1e-1), "mismatch vs f32 reference"

    print("KERNEL_OK")
</pallas_src>

<mosaic_0001>
module attributes {stable_mosaic.version = 11 : i64} {
  func.func @_encoder_layer_kernel(%arg0: i32, %arg1: i32, %arg2: memref<1x8x32xf32, #tpu.memory_space<vmem>>, %arg3: memref<1x8x32xf32, #tpu.memory_space<vmem>>, %arg4: memref<1x1x8xf32, #tpu.memory_space<vmem>>, %arg5: memref<32x32xbf16, #tpu.memory_space<vmem>>, %arg6: memref<1x32xf32, #tpu.memory_space<vmem>>, %arg7: memref<32x64xbf16, #tpu.memory_space<vmem>>, %arg8: memref<1x64xf32, #tpu.memory_space<vmem>>, %arg9: memref<32x32xbf16, #tpu.memory_space<vmem>>, %arg10: memref<1x32xf32, #tpu.memory_space<vmem>>, %arg11: memref<1x32xf32, #tpu.memory_space<vmem>>, %arg12: memref<1x32xf32, #tpu.memory_space<vmem>>, %arg13: memref<32x64xbf16, #tpu.memory_space<vmem>>, %arg14: memref<1x64xf32, #tpu.memory_space<vmem>>, %arg15: memref<64x32xbf16, #tpu.memory_space<vmem>>, %arg16: memref<1x32xf32, #tpu.memory_space<vmem>>, %arg17: memref<1x32xf32, #tpu.memory_space<vmem>>, %arg18: memref<1x32xf32, #tpu.memory_space<vmem>>, %arg19: memref<1x8x32xf32, #tpu.memory_space<vmem>>) attributes {dimension_semantics = [#tpu.dimension_semantics<parallel>, #tpu.dimension_semantics<parallel>], iteration_bounds = array<i64: 2, 1>, scalar_prefetch = 0 : i64, scratch_operands = 0 : i64, tpu.core_type = #tpu.core_type<tc>, window_params = [{transform_indices = @transform_0, window_bounds = array<i64: 1, 8, 32>}, {transform_indices = @transform_1, window_bounds = array<i64: 1, 8, 32>}, {transform_indices = @transform_2, window_bounds = array<i64: 1, 1, 8>}, {pipeline_mode = #tpu.pipeline_mode<synchronous>, transform_indices = @transform_3, window_bounds = array<i64: 32, 32>}, {pipeline_mode = #tpu.pipeline_mode<synchronous>, transform_indices = @transform_4, window_bounds = array<i64: 1, 32>}, {pipeline_mode = #tpu.pipeline_mode<synchronous>, transform_indices = @transform_5, window_bounds = array<i64: 32, 64>}, {pipeline_mode = #tpu.pipeline_mode<synchronous>, transform_indices = @transform_6, window_bounds = array<i64: 1, 64>}, {pipeline_mode = #tpu.pipeline_mode<synchronous>, transform_indices = @transform_7, window_bounds = array<i64: 32, 32>}, {pipeline_mode = #tpu.pipeline_mode<synchronous>, transform_indices = @transform_8, window_bounds = array<i64: 1, 32>}, {pipeline_mode = #tpu.pipeline_mode<synchronous>, transform_indices = @transform_9, window_bounds = array<i64: 1, 32>}, {pipeline_mode = #tpu.pipeline_mode<synchronous>, transform_indices = @transform_10, window_bounds = array<i64: 1, 32>}, {pipeline_mode = #tpu.pipeline_mode<synchronous>, transform_indices = @transform_11, window_bounds = array<i64: 32, 64>}, {pipeline_mode = #tpu.pipeline_mode<synchronous>, transform_indices = @transform_12, window_bounds = array<i64: 1, 64>}, {pipeline_mode = #tpu.pipeline_mode<synchronous>, transform_indices = @transform_13, window_bounds = array<i64: 64, 32>}, {pipeline_mode = #tpu.pipeline_mode<synchronous>, transform_indices = @transform_14, window_bounds = array<i64: 1, 32>}, {pipeline_mode = #tpu.pipeline_mode<synchronous>, transform_indices = @transform_15, window_bounds = array<i64: 1, 32>}, {pipeline_mode = #tpu.pipeline_mode<synchronous>, transform_indices = @transform_16, window_bounds = array<i64: 1, 32>}, {transform_indices = @transform_17, window_bounds = array<i64: 1, 8, 32>}]} {
    %c0 = arith.constant 0 : index
    %c0_0 = arith.constant 0 : index
    %c0_1 = arith.constant 0 : index
    %0 = vector.load %arg2[%c0, %c0_0, %c0_1] : memref<1x8x32xf32, #tpu.memory_space<vmem>>, vector<1x8x32xf32>
    %1 = vector.shape_cast %0 : vector<1x8x32xf32> to vector<8x32xf32>
    %c0_2 = arith.constant 0 : index
    %c0_3 = arith.constant 0 : index
    %c0_4 = arith.constant 0 : index
    %2 = vector.load %arg3[%c0_2, %c0_3, %c0_4] : memref<1x8x32xf32, #tpu.memory_space<vmem>>, vector<1x8x32xf32>
    %3 = vector.shape_cast %2 : vector<1x8x32xf32> to vector<8x32xf32>
    %c0_5 = arith.constant 0 : index
    %c0_6 = arith.constant 0 : index
    %c0_7 = arith.constant 0 : index
    %4 = vector.load %arg4[%c0_5, %c0_6, %c0_7] : memref<1x1x8xf32, #tpu.memory_space<vmem>>, vector<1x1x8xf32>
    %5 = vector.shape_cast %4 : vector<1x1x8xf32> to vector<1x8xf32>
    %6 = arith.truncf %1 : vector<8x32xf32> to vector<8x32xbf16>
    %7 = arith.truncf %3 : vector<8x32xf32> to vector<8x32xbf16>
    %c0_8 = arith.constant 0 : index
    %c0_9 = arith.constant 0 : index
    %8 = vector.load %arg5[%c0_8, %c0_9] : memref<32x32xbf16, #tpu.memory_space<vmem>>, vector<32x32xbf16>
    %cst = arith.constant dense<0.000000e+00> : vector<8x32xf32>
    %9 = tpu.matmul %6, %8, %cst {dimension_numbers = #tpu.dot_dimension_numbers<[1], [0], [0], [1], [0, 0, 1, 1], [], []>} : vector<8x32xbf16>, vector<32x32xbf16>, vector<8x32xf32> -> vector<8x32xf32>
    %c0_10 = arith.constant 0 : index
    %c0_11 = arith.constant 0 : index
    %10 = vector.load %arg6[%c0_10, %c0_11] : memref<1x32xf32, #tpu.memory_space<vmem>>, vector<1x32xf32>
    %11 = vector.broadcast %10 : vector<1x32xf32> to vector<8x32xf32>
    %12 = arith.addf %9, %11 : vector<8x32xf32>
    %c0_12 = arith.constant 0 : index
    %c0_13 = arith.constant 0 : index
    %13 = vector.load %arg7[%c0_12, %c0_13] : memref<32x64xbf16, #tpu.memory_space<vmem>>, vector<32x64xbf16>
    %cst_14 = arith.constant dense<0.000000e+00> : vector<8x64xf32>
    %14 = tpu.matmul %7, %13, %cst_14 {dimension_numbers = #tpu.dot_dimension_numbers<[1], [0], [0], [1], [0, 0, 1, 1], [], []>} : vector<8x32xbf16>, vector<32x64xbf16>, vector<8x64xf32> -> vector<8x64xf32>
    %c0_15 = arith.constant 0 : index
    %c0_16 = arith.constant 0 : index
    %15 = vector.load %arg8[%c0_15, %c0_16] : memref<1x64xf32, #tpu.memory_space<vmem>>, vector<1x64xf32>
    %16 = vector.broadcast %15 : vector<1x64xf32> to vector<8x64xf32>
    %17 = arith.addf %14, %16 : vector<8x64xf32>
    %18 = vector.extract_strided_slice %17 {offsets = [0, 0], sizes = [8, 32], strides = [1, 1]} : vector<8x64xf32> to vector<8x32xf32>
    %19 = vector.extract_strided_slice %17 {offsets = [0, 32], sizes = [8, 32], strides = [1, 1]} : vector<8x64xf32> to vector<8x32xf32>
    %cst_17 = arith.constant 0.353553385 : f32
    %20 = vector.broadcast %cst_17 : f32 to vector<8x32xf32>
    %21 = arith.mulf %12, %20 : vector<8x32xf32>
    %22 = vector.extract_strided_slice %21 {offsets = [0, 0], sizes = [8, 8], strides = [1, 1]} : vector<8x32xf32> to vector<8x8xf32>
    %23 = vector.shape_cast %22 : vector<8x8xf32> to vector<1x8x8xf32>
    %24 = vector.extract_strided_slice %21 {offsets = [0, 8], sizes = [8, 8], strides = [1, 1]} : vector<8x32xf32> to vector<8x8xf32>
    %25 = vector.shape_cast %24 : vector<8x8xf32> to vector<1x8x8xf32>
    %26 = vector.extract_strided_slice %21 {offsets = [0, 16], sizes = [8, 8], strides = [1, 1]} : vector<8x32xf32> to vector<8x8xf32>
    %27 = vector.shape_cast %26 : vector<8x8xf32> to vector<1x8x8xf32>
    %28 = vector.extract_strided_slice %21 {offsets = [0, 24], sizes = [8, 8], strides = [1, 1]} : vector<8x32xf32> to vector<8x8xf32>
    %29 = vector.shape_cast %28 : vector<8x8xf32> to vector<1x8x8xf32>
    %30 = tpu.concatenate %23, %25, %27, %29 in 0 : vector<1x8x8xf32>, vector<1x8x8xf32>, vector<1x8x8xf32>, vector<1x8x8xf32> -> vector<4x8x8xf32>
    %31 = arith.truncf %30 : vector<4x8x8xf32> to vector<4x8x8xbf16>
    %32 = vector.extract_strided_slice %18 {offsets = [0, 0], sizes = [8, 8], strides = [1, 1]} : vector<8x32xf32> to vector<8x8xf32>
    %33 = vector.shape_cast %32 : vector<8x8xf32> to vector<1x8x8xf32>
    %34 = vector.extract_strided_slice %18 {offsets = [0, 8], sizes = [8, 8], strides = [1, 1]} : vector<8x32xf32> to vector<8x8xf32>
    %35 = vector.shape_cast %34 : vector<8x8xf32> to vector<1x8x8xf32>
    %36 = vector.extract_strided_slice %18 {offsets = [0, 16], sizes = [8, 8], strides = [1, 1]} : vector<8x32xf32> to vector<8x8xf32>
    %37 = vector.shape_cast %36 : vector<8x8xf32> to vector<1x8x8xf32>
    %38 = vector.extract_strided_slice %18 {offsets = [0, 24], sizes = [8, 8], strides = [1, 1]} : vector<8x32xf32> to vector<8x8xf32>
    %39 = vector.shape_cast %38 : vector<8x8xf32> to vector<1x8x8xf32>
    %40 = tpu.concatenate %33, %35, %37, %39 in 0 : vector<1x8x8xf32>, vector<1x8x8xf32>, vector<1x8x8xf32>, vector<1x8x8xf32> -> vector<4x8x8xf32>
    %41 = arith.truncf %40 : vector<4x8x8xf32> to vector<4x8x8xbf16>
    %42 = vector.extract_strided_slice %19 {offsets = [0, 0], sizes = [8, 8], strides = [1, 1]} : vector<8x32xf32> to vector<8x8xf32>
    %43 = vector.shape_cast %42 : vector<8x8xf32> to vector<1x8x8xf32>
    %44 = vector.extract_strided_slice %19 {offsets = [0, 8], sizes = [8, 8], strides = [1, 1]} : vector<8x32xf32> to vector<8x8xf32>
    %45 = vector.shape_cast %44 : vector<8x8xf32> to vector<1x8x8xf32>
    %46 = vector.extract_strided_slice %19 {offsets = [0, 16], sizes = [8, 8], strides = [1, 1]} : vector<8x32xf32> to vector<8x8xf32>
    %47 = vector.shape_cast %46 : vector<8x8xf32> to vector<1x8x8xf32>
    %48 = vector.extract_strided_slice %19 {offsets = [0, 24], sizes = [8, 8], strides = [1, 1]} : vector<8x32xf32> to vector<8x8xf32>
    %49 = vector.shape_cast %48 : vector<8x8xf32> to vector<1x8x8xf32>
    %50 = tpu.concatenate %43, %45, %47, %49 in 0 : vector<1x8x8xf32>, vector<1x8x8xf32>, vector<1x8x8xf32>, vector<1x8x8xf32> -> vector<4x8x8xf32>
    %51 = arith.truncf %50 : vector<4x8x8xf32> to vector<4x8x8xbf16>
    "tpu.trace_start"() <{level = 10 : i32, message = "hqd,hkd->hqk"}> : () -> ()
    %cst_18 = arith.constant dense<0.000000e+00> : vector<4x8x8xf32>
    %52 = tpu.matmul %31, %41, %cst_18 {dimension_numbers = #tpu.dot_dimension_numbers<[2], [2], [1], [1], [0, 0, 0, 1, 1, 1], [0], [0]>} : vector<4x8x8xbf16>, vector<4x8x8xbf16>, vector<4x8x8xf32> -> vector<4x8x8xf32>
    %cst_19 = arith.constant 0.000000e+00 : f32
    "tpu.trace_stop"() : () -> ()
    %53 = vector.broadcast %cst_19 : f32 to vector<1x8xf32>
    %54 = arith.cmpf oeq, %5, %53 : vector<1x8xf32>
    %cst_20 = arith.constant -1.000000e+09 : f32
    %cst_21 = arith.constant 0.000000e+00 : f32
    %55 = vector.broadcast %cst_20 : f32 to vector<1x8xf32>
    %56 = vector.broadcast %cst_21 : f32 to vector<1x8xf32>
    %57 = arith.select %54, %55, %56 : vector<1x8xi1>, vector<1x8xf32>
    %58 = vector.shape_cast %57 : vector<1x8xf32> to vector<1x1x8xf32>
    %59 = vector.broadcast %58 : vector<1x1x8xf32> to vector<4x8x8xf32>
    %60 = arith.addf %52, %59 : vector<4x8x8xf32>
    %cst_22 = arith.constant dense<0xFF800000> : vector<4x8xf32>
    %61 = vector.multi_reduction <maximumf>, %60, %cst_22 [2] : vector<4x8x8xf32> to vector<4x8xf32>
    %62 = vector.shape_cast %61 : vector<4x8xf32> to vector<4x8x1xf32>
    %63 = vector.broadcast %62 : vector<4x8x1xf32> to vector<4x8x8xf32>
    %64 = arith.subf %60, %63 : vector<4x8x8xf32>
    %65 = math.exp %64 : vector<4x8x8xf32>
    %cst_23 = arith.constant dense<0.000000e+00> : vector<4x8xf32>
    %66 = vector.multi_reduction <add>, %65, %cst_23 [2] : vector<4x8x8xf32> to vector<4x8xf32>
    %67 = vector.shape_cast %66 : vector<4x8xf32> to vector<4x8x1xf32>
    %68 = tpu.reciprocal %67 {approx = true} : vector<4x8x1xf32> -> vector<4x8x1xf32>
    %69 = vector.broadcast %68 : vector<4x8x1xf32> to vector<4x8x8xf32>
    %70 = arith.mulf %65, %69 : vector<4x8x8xf32>
    %71 = arith.truncf %70 : vector<4x8x8xf32> to vector<4x8x8xbf16>
    "tpu.trace_start"() <{level = 10 : i32, message = "hqk,hkd->hqd"}> : () -> ()
    %cst_24 = arith.constant dense<0.000000e+00> : vector<4x8x8xf32>
    %72 = tpu.matmul %71, %51, %cst_24 {dimension_numbers = #tpu.dot_dimension_numbers<[2], [1], [1], [2], [0, 0, 0, 1, 1, 2], [0], [0]>} : vector<4x8x8xbf16>, vector<4x8x8xbf16>, vector<4x8x8xf32> -> vector<4x8x8xf32>
    "tpu.trace_stop"() : () -> ()
    %73 = vector.extract_strided_slice %72 {offsets = [0, 0, 0], sizes = [1, 8, 8], strides = [1, 1, 1]} : vector<4x8x8xf32> to vector<1x8x8xf32>
    %74 = vector.shape_cast %73 : vector<1x8x8xf32> to vector<8x8xf32>
    %75 = vector.extract_strided_slice %72 {offsets = [1, 0, 0], sizes = [1, 8, 8], strides = [1, 1, 1]} : vector<4x8x8xf32> to vector<1x8x8xf32>
    %76 = vector.shape_cast %75 : vector<1x8x8xf32> to vector<8x8xf32>
    %77 = vector.extract_strided_slice %72 {offsets = [2, 0, 0], sizes = [1, 8, 8], strides = [1, 1, 1]} : vector<4x8x8xf32> to vector<1x8x8xf32>
    %78 = vector.shape_cast %77 : vector<1x8x8xf32> to vector<8x8xf32>
    %79 = vector.extract_strided_slice %72 {offsets = [3, 0, 0], sizes = [1, 8, 8], strides = [1, 1, 1]} : vector<4x8x8xf32> to vector<1x8x8xf32>
    %80 = vector.shape_cast %79 : vector<1x8x8xf32> to vector<8x8xf32>
    %81 = tpu.concatenate %74, %76, %78, %80 in 1 : vector<8x8xf32>, vector<8x8xf32>, vector<8x8xf32>, vector<8x8xf32> -> vector<8x32xf32>
    %82 = arith.truncf %81 : vector<8x32xf32> to vector<8x32xbf16>
    %c0_25 = arith.constant 0 : index
    %c0_26 = arith.constant 0 : index
    %83 = vector.load %arg9[%c0_25, %c0_26] : memref<32x32xbf16, #tpu.memory_space<vmem>>, vector<32x32xbf16>
    %cst_27 = arith.constant dense<0.000000e+00> : vector<8x32xf32>
    %84 = tpu.matmul %82, %83, %cst_27 {dimension_numbers = #tpu.dot_dimension_numbers<[1], [0], [0], [1], [0, 0, 1, 1], [], []>} : vector<8x32xbf16>, vector<32x32xbf16>, vector<8x32xf32> -> vector<8x32xf32>
    %c0_28 = arith.constant 0 : index
    %c0_29 = arith.constant 0 : index
    %85 = vector.load %arg10[%c0_28, %c0_29] : memref<1x32xf32, #tpu.memory_space<vmem>>, vector<1x32xf32>
    %86 = vector.broadcast %85 : vector<1x32xf32> to vector<8x32xf32>
    %87 = arith.addf %84, %86 : vector<8x32xf32>
    %88 = arith.addf %1, %87 : vector<8x32xf32>
    %cst_30 = arith.constant dense<0.000000e+00> : vector<8xf32>
    %89 = vector.multi_reduction <add>, %88, %cst_30 [1] : vector<8x32xf32> to vector<8xf32>
    %90 = vector.shape_cast %89 : vector<8xf32> to vector<8x1xf32>
    %cst_31 = arith.constant 3.200000e+01 : f32
    %91 = vector.broadcast %cst_31 : f32 to vector<8x1xf32>
    %92 = arith.divf %90, %91 : vector<8x1xf32>
    %93 = vector.broadcast %92 : vector<8x1xf32> to vector<8x32xf32>
    %94 = arith.subf %88, %93 : vector<8x32xf32>
    %95 = arith.mulf %94, %94 : vector<8x32xf32>
    %cst_32 = arith.constant dense<0.000000e+00> : vector<8xf32>
    %96 = vector.multi_reduction <add>, %95, %cst_32 [1] : vector<8x32xf32> to vector<8xf32>
    %97 = vector.shape_cast %96 : vector<8xf32> to vector<8x1xf32>
    %cst_33 = arith.constant 3.200000e+01 : f32
    %98 = vector.broadcast %cst_33 : f32 to vector<8x1xf32>
    %99 = arith.divf %97, %98 : vector<8x1xf32>
    %100 = vector.broadcast %92 : vector<8x1xf32> to vector<8x32xf32>
    %101 = arith.subf %88, %100 : vector<8x32xf32>
    %cst_34 = arith.constant 9.99999974E-6 : f32
    %102 = vector.broadcast %cst_34 : f32 to vector<8x1xf32>
    %103 = arith.addf %99, %102 : vector<8x1xf32>
    %104 = math.rsqrt %103 : vector<8x1xf32>
    %105 = vector.broadcast %104 : vector<8x1xf32> to vector<8x32xf32>
    %106 = arith.mulf %101, %105 : vector<8x32xf32>
    %c0_35 = arith.constant 0 : index
    %c0_36 = arith.constant 0 : index
    %107 = vector.load %arg11[%c0_35, %c0_36] : memref<1x32xf32, #tpu.memory_space<vmem>>, vector<1x32xf32>
    %108 = vector.broadcast %107 : vector<1x32xf32> to vector<8x32xf32>
    %109 = arith.mulf %106, %108 : vector<8x32xf32>
    %c0_37 = arith.constant 0 : index
    %c0_38 = arith.constant 0 : index
    %110 = vector.load %arg12[%c0_37, %c0_38] : memref<1x32xf32, #tpu.memory_space<vmem>>, vector<1x32xf32>
    %111 = vector.broadcast %110 : vector<1x32xf32> to vector<8x32xf32>
    %112 = arith.addf %109, %111 : vector<8x32xf32>
    %113 = arith.truncf %112 : vector<8x32xf32> to vector<8x32xbf16>
    %c0_39 = arith.constant 0 : index
    %c0_40 = arith.constant 0 : index
    %114 = vector.load %arg13[%c0_39, %c0_40] : memref<32x64xbf16, #tpu.memory_space<vmem>>, vector<32x64xbf16>
    %cst_41 = arith.constant dense<0.000000e+00> : vector<8x64xf32>
    %115 = tpu.matmul %113, %114, %cst_41 {dimension_numbers = #tpu.dot_dimension_numbers<[1], [0], [0], [1], [0, 0, 1, 1], [], []>} : vector<8x32xbf16>, vector<32x64xbf16>, vector<8x64xf32> -> vector<8x64xf32>
    %c0_42 = arith.constant 0 : index
    %c0_43 = arith.constant 0 : index
    %116 = vector.load %arg14[%c0_42, %c0_43] : memref<1x64xf32, #tpu.memory_space<vmem>>, vector<1x64xf32>
    %117 = vector.broadcast %116 : vector<1x64xf32> to vector<8x64xf32>
    %118 = arith.addf %115, %117 : vector<8x64xf32>
    %cst_44 = arith.constant 0.000000e+00 : f32
    %119 = vector.broadcast %cst_44 : f32 to vector<8x64xf32>
    %120 = arith.maximumf %118, %119 : vector<8x64xf32>
    %121 = arith.truncf %120 : vector<8x64xf32> to vector<8x64xbf16>
    %c0_45 = arith.constant 0 : index
    %c0_46 = arith.constant 0 : index
    %122 = vector.load %arg15[%c0_45, %c0_46] : memref<64x32xbf16, #tpu.memory_space<vmem>>, vector<64x32xbf16>
    %cst_47 = arith.constant dense<0.000000e+00> : vector<8x32xf32>
    %123 = tpu.matmul %121, %122, %cst_47 {dimension_numbers = #tpu.dot_dimension_numbers<[1], [0], [0], [1], [0, 0, 1, 1], [], []>} : vector<8x64xbf16>, vector<64x32xbf16>, vector<8x32xf32> -> vector<8x32xf32>
    %c0_48 = arith.constant 0 : index
    %c0_49 = arith.constant 0 : index
    %124 = vector.load %arg16[%c0_48, %c0_49] : memref<1x32xf32, #tpu.memory_space<vmem>>, vector<1x32xf32>
    %125 = vector.broadcast %124 : vector<1x32xf32> to vector<8x32xf32>
    %126 = arith.addf %123, %125 : vector<8x32xf32>
    %127 = arith.addf %112, %126 : vector<8x32xf32>
    %cst_50 = arith.constant dense<0.000000e+00> : vector<8xf32>
    %128 = vector.multi_reduction <add>, %127, %cst_50 [1] : vector<8x32xf32> to vector<8xf32>
    %129 = vector.shape_cast %128 : vector<8xf32> to vector<8x1xf32>
    %cst_51 = arith.constant 3.200000e+01 : f32
    %130 = vector.broadcast %cst_51 : f32 to vector<8x1xf32>
    %131 = arith.divf %129, %130 : vector<8x1xf32>
    %132 = vector.broadcast %131 : vector<8x1xf32> to vector<8x32xf32>
    %133 = arith.subf %127, %132 : vector<8x32xf32>
    %134 = arith.mulf %133, %133 : vector<8x32xf32>
    %cst_52 = arith.constant dense<0.000000e+00> : vector<8xf32>
    %135 = vector.multi_reduction <add>, %134, %cst_52 [1] : vector<8x32xf32> to vector<8xf32>
    %136 = vector.shape_cast %135 : vector<8xf32> to vector<8x1xf32>
    %cst_53 = arith.constant 3.200000e+01 : f32
    %137 = vector.broadcast %cst_53 : f32 to vector<8x1xf32>
    %138 = arith.divf %136, %137 : vector<8x1xf32>
    %139 = vector.broadcast %131 : vector<8x1xf32> to vector<8x32xf32>
    %140 = arith.subf %127, %139 : vector<8x32xf32>
    %cst_54 = arith.constant 9.99999974E-6 : f32
    %141 = vector.broadcast %cst_54 : f32 to vector<8x1xf32>
    %142 = arith.addf %138, %141 : vector<8x1xf32>
    %143 = math.rsqrt %142 : vector<8x1xf32>
    %144 = vector.broadcast %143 : vector<8x1xf32> to vector<8x32xf32>
    %145 = arith.mulf %140, %144 : vector<8x32xf32>
    %c0_55 = arith.constant 0 : index
    %c0_56 = arith.constant 0 : index
    %146 = vector.load %arg17[%c0_55, %c0_56] : memref<1x32xf32, #tpu.memory_space<vmem>>, vector<1x32xf32>
    %147 = vector.broadcast %146 : vector<1x32xf32> to vector<8x32xf32>
    %148 = arith.mulf %145, %147 : vector<8x32xf32>
    %c0_57 = arith.constant 0 : index
    %c0_58 = arith.constant 0 : index
    %149 = vector.load %arg18[%c0_57, %c0_58] : memref<1x32xf32, #tpu.memory_space<vmem>>, vector<1x32xf32>
    %150 = vector.broadcast %149 : vector<1x32xf32> to vector<8x32xf32>
    %151 = arith.addf %148, %150 : vector<8x32xf32>
    %c0_59 = arith.constant 0 : index
    %c0_60 = arith.constant 0 : index
    %c0_61 = arith.constant 0 : index
    %152 = vector.load %arg19[%c0_59, %c0_60, %c0_61] : memref<1x8x32xf32, #tpu.memory_space<vmem>>, vector<1x8x32xf32>
    %153 = vector.shape_cast %152 : vector<1x8x32xf32> to vector<8x32xf32>
    %154 = vector.shape_cast %151 : vector<8x32xf32> to vector<1x8x32xf32>
    tpu.vector_store %arg19[%c0_59, %c0_60, %c0_61], %154 {strides = array<i32>} : memref<1x8x32xf32, #tpu.memory_space<vmem>>, vector<1x8x32xf32>,
    return
  }
  func.func @transform_0(%arg0: i32, %arg1: i32) -> (i32, i32, i32) {
    %c0_i32 = arith.constant 0 : i32
    %c0_i32_0 = arith.constant 0 : i32
    return %arg0, %arg1, %c0_i32 : i32, i32, i32
  }
  func.func @transform_1(%arg0: i32, %arg1: i32) -> (i32, i32, i32) {
    %c0_i32 = arith.constant 0 : i32
    %c0_i32_0 = arith.constant 0 : i32
    %c0_i32_1 = arith.constant 0 : i32
    return %arg0, %c0_i32, %c0_i32_0 : i32, i32, i32
  }
  func.func @transform_2(%arg0: i32, %arg1: i32) -> (i32, i32, i32) {
    %c0_i32 = arith.constant 0 : i32
    %c0_i32_0 = arith.constant 0 : i32
    %c0_i32_1 = arith.constant 0 : i32
    return %arg0, %c0_i32, %c0_i32_0 : i32, i32, i32
  }
  func.func @transform_3(%arg0: i32, %arg1: i32) -> (i32, i32) {
    %c0_i32 = arith.constant 0 : i32
    %c0_i32_0 = arith.constant 0 : i32
    %c0_i32_1 = arith.constant 0 : i32
    return %c0_i32, %c0_i32_0 : i32, i32
  }
  func.func @transform_4(%arg0: i32, %arg1: i32) -> (i32, i32) {
    %c0_i32 = arith.constant 0 : i32
    %c0_i32_0 = arith.constant 0 : i32
    %c0_i32_1 = arith.constant 0 : i32
    return %c0_i32, %c0_i32_0 : i32, i32
  }
  func.func @transform_5(%arg0: i32, %arg1: i32) -> (i32, i32) {
    %c0_i32 = arith.constant 0 : i32
    %c0_i32_0 = arith.constant 0 : i32
    %c0_i32_1 = arith.constant 0 : i32
    return %c0_i32, %c0_i32_0 : i32, i32
  }
  func.func @transform_6(%arg0: i32, %arg1: i32) -> (i32, i32) {
    %c0_i32 = arith.constant 0 : i32
    %c0_i32_0 = arith.constant 0 : i32
    %c0_i32_1 = arith.constant 0 : i32
    return %c0_i32, %c0_i32_0 : i32, i32
  }
  func.func @transform_7(%arg0: i32, %arg1: i32) -> (i32, i32) {
    %c0_i32 = arith.constant 0 : i32
    %c0_i32_0 = arith.constant 0 : i32
    %c0_i32_1 = arith.constant 0 : i32
    return %c0_i32, %c0_i32_0 : i32, i32
  }
  func.func @transform_8(%arg0: i32, %arg1: i32) -> (i32, i32) {
    %c0_i32 = arith.constant 0 : i32
    %c0_i32_0 = arith.constant 0 : i32
    %c0_i32_1 = arith.constant 0 : i32
    return %c0_i32, %c0_i32_0 : i32, i32
  }
  func.func @transform_9(%arg0: i32, %arg1: i32) -> (i32, i32) {
    %c0_i32 = arith.constant 0 : i32
    %c0_i32_0 = arith.constant 0 : i32
    %c0_i32_1 = arith.constant 0 : i32
    return %c0_i32, %c0_i32_0 : i32, i32
  }
  func.func @transform_10(%arg0: i32, %arg1: i32) -> (i32, i32) {
    %c0_i32 = arith.constant 0 : i32
    %c0_i32_0 = arith.constant 0 : i32
    %c0_i32_1 = arith.constant 0 : i32
    return %c0_i32, %c0_i32_0 : i32, i32
  }
  func.func @transform_11(%arg0: i32, %arg1: i32) -> (i32, i32) {
    %c0_i32 = arith.constant 0 : i32
    %c0_i32_0 = arith.constant 0 : i32
    %c0_i32_1 = arith.constant 0 : i32
    return %c0_i32, %c0_i32_0 : i32, i32
  }
  func.func @transform_12(%arg0: i32, %arg1: i32) -> (i32, i32) {
    %c0_i32 = arith.constant 0 : i32
    %c0_i32_0 = arith.constant 0 : i32
    %c0_i32_1 = arith.constant 0 : i32
    return %c0_i32, %c0_i32_0 : i32, i32
  }
  func.func @transform_13(%arg0: i32, %arg1: i32) -> (i32, i32) {
    %c0_i32 = arith.constant 0 : i32
    %c0_i32_0 = arith.constant 0 : i32
    %c0_i32_1 = arith.constant 0 : i32
    return %c0_i32, %c0_i32_0 : i32, i32
  }
  func.func @transform_14(%arg0: i32, %arg1: i32) -> (i32, i32) {
    %c0_i32 = arith.constant 0 : i32
    %c0_i32_0 = arith.constant 0 : i32
    %c0_i32_1 = arith.constant 0 : i32
    return %c0_i32, %c0_i32_0 : i32, i32
  }
  func.func @transform_15(%arg0: i32, %arg1: i32) -> (i32, i32) {
    %c0_i32 = arith.constant 0 : i32
    %c0_i32_0 = arith.constant 0 : i32
    %c0_i32_1 = arith.constant 0 : i32
    return %c0_i32, %c0_i32_0 : i32, i32
  }
  func.func @transform_16(%arg0: i32, %arg1: i32) -> (i32, i32) {
    %c0_i32 = arith.constant 0 : i32
    %c0_i32_0 = arith.constant 0 : i32
    %c0_i32_1 = arith.constant 0 : i32
    return %c0_i32, %c0_i32_0 : i32, i32
  }
  func.func @transform_17(%arg0: i32, %arg1: i32) -> (i32, i32, i32) {
    %c0_i32 = arith.constant 0 : i32
    %c0_i32_0 = arith.constant 0 : i32
    return %arg0, %arg1, %c0_i32 : i32, i32, i32
  }
}

</mosaic_0001>

<llo_original>
// kernel: tpu_custom_call.1
$region0: #{tpu_custom_call.1}
  #allocation0 [shape = 'u32[]', space=smem, size = 0x4, offset = 0x4, fixed_abs, tag = 'smem constant byte address 0x4 - core index']
  #allocation1 [shape = 'u32[144,128]{1,0:T(1,128)}', space=vmem, size = 0x12000, scoped, tag = 'internal scratch']
  %s0 = inlined_call_operand.vmem [shape: f32[2,8,32], index: 0, kind: input, shape index: {}]
  %s1 = inlined_call_operand.vmem [shape: f32[2,8,32], index: 1, kind: input, shape index: {}]
  %s2 = inlined_call_operand.vmem [shape: f32[2,1,8], index: 2, kind: input, shape index: {}]
  %s3 = inlined_call_operand.vmem [shape: bf16[32,32], index: 3, kind: input, shape index: {}]
  %s4 = inlined_call_operand.hbm [shape: f32[1,32], index: 4, kind: input, shape index: {}]
  %s5 = inlined_call_operand.hbm [shape: bf16[32,64], index: 5, kind: input, shape index: {}]
  %s6 = inlined_call_operand.hbm [shape: f32[1,64], index: 6, kind: input, shape index: {}]
  %s7 = inlined_call_operand.hbm [shape: bf16[32,32], index: 7, kind: input, shape index: {}]
  %s8 = inlined_call_operand.hbm [shape: f32[1,32], index: 8, kind: input, shape index: {}]
  %s9 = inlined_call_operand.hbm [shape: f32[1,32], index: 9, kind: input, shape index: {}]
  %s10 = inlined_call_operand.vmem [shape: f32[1,32], index: 10, kind: input, shape index: {}]
  %s11 = inlined_call_operand.vmem [shape: bf16[32,64], index: 11, kind: input, shape index: {}]
  %s12 = inlined_call_operand.vmem [shape: f32[1,64], index: 12, kind: input, shape index: {}]
  %s13 = inlined_call_operand.vmem [shape: bf16[64,32], index: 13, kind: input, shape index: {}]
  %s14 = inlined_call_operand.vmem [shape: f32[1,32], index: 14, kind: input, shape index: {}]
  %s15 = inlined_call_operand.vmem [shape: f32[1,32], index: 15, kind: input, shape index: {}]
  %s16 = inlined_call_operand.vmem [shape: f32[1,32], index: 16, kind: input, shape index: {}]
  %s17 = inlined_call_operand.hbm [shape: f32[2,8,32], index: 17, kind: output, shape index: {}]
  %s18 = sld [smem:[#allocation0]]
  $region125: #{tpu_custom_call.1} parent=0
    _
  %s20 = ssub.s32 1, %s18
  %s21 = scalar_select 0, %s20, %s18
  $region1: #{tpu_custom_call.1} parent=0
    #allocation2 [shape = 'u8[512]{0}', space=vmem, size = 0x400, scoped, tag = 'input window, operand 4, single buffered']
    #allocation3 [shape = 's32[2]{0}', space=sflag, size = 0x8, scoped, tag = 'scoped memory for tpu_custom_call.1']
    #allocation4 [shape = 's32[2]{0}', space=sflag, size = 0x8, scoped, tag = 'scoped memory for tpu_custom_call.1']
    #allocation5 [shape = 'u8[8192]{0}', space=vmem, size = 0x2000, scoped, tag = 'input window, operand 5, single buffered']
    #allocation6 [shape = 's32[1]{0}', space=sflag, size = 0x4, scoped, tag = 'scoped memory for tpu_custom_call.1']
    #allocation7 [shape = 'u8[512]{0}', space=vmem, size = 0x400, scoped, tag = 'input window, operand 6, single buffered']
    #allocation8 [shape = 'u8[8192]{0}', space=vmem, size = 0x2000, scoped, tag = 'input window, operand 7, single buffered']
    #allocation9 [shape = 's32[1]{0}', space=sflag, size = 0x4, scoped, tag = 'scoped memory for tpu_custom_call.1']
    #allocation10 [shape = 'u8[512]{0}', space=vmem, size = 0x400, scoped, tag = 'input window, operand 8, single buffered']
    #allocation11 [shape = 'u8[512]{0}', space=vmem, size = 0x400, scoped, tag = 'input window, operand 9, single buffered']
    #allocation12 [shape = 's32[1]{0}', space=sflag, size = 0x4, scoped, tag = 'scoped memory for tpu_custom_call.1']
    #allocation13 [shape = 'u8[8192]{0}', space=vmem, size = 0x2000, scoped, tag = 'output window, operand 0']
    %22 = vsyncpa [#allocation3], 0
    %23 = vsyncpa [#allocation6], 0
    %24 = vsyncpa [#allocation9], 0
    %25 = vsyncpa [#allocation12], 0
    %26 = vsyncpa [#allocation4], 0
    %s27 = scalar_lea.sflag [#allocation4], 1
    %28 = vsyncpa %s27, 0
    loop: start=0, step=1, limit=4
    $region2: #{tpu_custom_call.1} parent=1 // loop_pre_header
      _
    $region3: #{tpu_custom_call.1} parent=1 // loop_header
      %s30 = sphi 0, %s34
      %p31 = scmp.ge.s32.totalorder %s30, 4
      %s37 = sphi 0, %s49
      %s38 = sphi 0, %s45
      %s39 = sphi 0, %s37
      %s40 = sphi 0, %s38
      %s41 = sphi 0, %s39
      %s42 = sphi 0, %s40
      %s54 = sphi 0, %s56
      %s57 = sphi 0, %s54
      %s58 = sphi 0, %s57
      %s74 = sphi 0, %s58
      %s80 = sphi 0, %s82
      %s83 = sphi 0, %s80
      %s84 = sphi 0, %s83
      %s100 = sphi 0, %s84
      %s106 = sphi 0, %s108
      %s109 = sphi 0, %s106
      %s110 = sphi 0, %s109
      %s126 = sphi 0, %s110
      %s130 = sphi 0, %s130
      %s132 = sphi 0, %s130
      %s133 = sphi 0, %s132
      %s147 = sphi 0, %s133
      %s151 = sphi 0, %s151
      %s153 = sphi 0, %s151
      %s154 = sphi 0, %s153
      %s168 = sphi 0, %s154
      %s172 = sphi 0, %s172
      %s174 = sphi 0, %s172
      %s175 = sphi 0, %s174
      %s189 = sphi 0, %s175
      %s193 = sphi 0, %s193
      %s195 = sphi 0, %s193
      %s196 = sphi 0, %s195
      %s210 = sphi 0, %s196
      %s214 = sphi 0, %s214
      %s216 = sphi 0, %s214
      %s217 = sphi 0, %s216
      %s231 = sphi 0, %s217
      %s235 = sphi 0, %s235
      %s237 = sphi 0, %s235
      %s238 = sphi 0, %s237
      %s252 = sphi 0, %s238
      %s256 = sphi 0, %s256
      %s258 = sphi 0, %s256
      %s259 = sphi 0, %s258
      %s273 = sphi 0, %s259
      %s277 = sphi 0, %s277
      %s279 = sphi 0, %s277
      %s280 = sphi 0, %s279
      %s294 = sphi 0, %s280
      %s298 = sphi 0, %s298
      %s300 = sphi 0, %s298
      %s301 = sphi 0, %s300
      %s315 = sphi 0, %s301
      %s319 = sphi 0, %s319
      %s321 = sphi 0, %s319
      %s322 = sphi 0, %s321
      %s336 = sphi 0, %s322
      %s340 = sphi 0, %s340
      %s342 = sphi 0, %s340
      %s343 = sphi 0, %s342
      %s357 = sphi 0, %s343
      %s361 = sphi 0, %s361
      %s363 = sphi 0, %s361
      %s364 = sphi 0, %s363
      %s378 = sphi 0, %s364
      %s382 = sphi 0, %s382
      %s384 = sphi 0, %s382
      %s385 = sphi 0, %s384
      %s399 = sphi 0, %s385
      %s403 = sphi 0, %s403
      %s405 = sphi 0, %s403
      %s406 = sphi 0, %s405
      %s420 = sphi 0, %s406
      %s428 = sphi 0, %s430
      %s431 = sphi 0, %s428
      %s432 = sphi 0, %s431
      %s448 = sphi 0, %s432
    $region4: #{tpu_custom_call.1} parent=1 // loop_header_branch
      %33 = sbr.rel (%p31) target = $region8
    $region5: #{tpu_custom_call.1} parent=1 // loop_body
      %s35 = ssub.s32 %s30, 1
      %s36 = ssub.s32 %s30, 2
      %s43 = sadd.s32 1, %s38
      %p44 = scmp.ge.s32.totalorder %s43, 1
      %s45 = scalar_select %p44, 0, %s43
      %s46 = sadd.s32 1, %s37
      %s47 = scalar_select %p44, %s46, %s37
      %p48 = scmp.ge.s32.totalorder %s47, 2
      %s49 = scalar_select %p48, 0, %s47
      %s50 = ssub.s32 %s37, %s49
      %s51 = ssub.s32 %s38, %s45
      %s52 = sor.u32 %s50, %s51
      %p53 = scmp.eq.s32.totalorder %s52, 0
      %s55 = sadd.s32 %s54, 1
      %s56 = scalar_select %p53, %s54, %s55
      %p59 = pneg %p53
      %p60 = scmp.eq.s32.totalorder %s30, 1
      %p61 = por %p59, %p60
      %p62 = scmp.ne.s32.totalorder %s54, %s57
      %p63 = scmp.eq.s32.totalorder %s30, 0
      %p64 = por %p62, %p63
      %p65 = scmp.ne.s32.totalorder %s54, %s57
      %p66 = scmp.eq.s32.totalorder %s35, 1
      %p67 = por %p65, %p66
      %p68 = scmp.ne.s32.totalorder %s57, %s58
      %p69 = scmp.eq.s32.totalorder %s35, 0
      %p70 = por %p68, %p69
      %p71 = scmp.ne.s32.totalorder %s57, %s58
      %p72 = scmp.eq.s32.totalorder %s36, 1
      %p73 = por %p71, %p72
      %p75 = scmp.ne.s32.totalorder %s58, %s74
      %p76 = scmp.eq.s32.totalorder %s36, 0
      %p77 = por %p75, %p76
      %s78 = ssub.s32 %s37, %s49
      %p79 = scmp.eq.s32.totalorder %s78, 0
      %s81 = sadd.s32 %s80, 1
      %s82 = scalar_select %p79, %s80, %s81
      %p85 = pneg %p79
      %p86 = scmp.eq.s32.totalorder %s30, 1
      %p87 = por %p85, %p86
      %p88 = scmp.ne.s32.totalorder %s80, %s83
      %p89 = scmp.eq.s32.totalorder %s30, 0
      %p90 = por %p88, %p89
      %p91 = scmp.ne.s32.totalorder %s80, %s83
      %p92 = scmp.eq.s32.totalorder %s35, 1
      %p93 = por %p91, %p92
      %p94 = scmp.ne.s32.totalorder %s83, %s84
      %p95 = scmp.eq.s32.totalorder %s35, 0
      %p96 = por %p94, %p95
      %p97 = scmp.ne.s32.totalorder %s83, %s84
      %p98 = scmp.eq.s32.totalorder %s36, 1
      %p99 = por %p97, %p98
      %p101 = scmp.ne.s32.totalorder %s84, %s100
      %p102 = scmp.eq.s32.totalorder %s36, 0
      %p103 = por %p101, %p102
      %s104 = ssub.s32 %s37, %s49
      %p105 = scmp.eq.s32.totalorder %s104, 0
      %s107 = sadd.s32 %s106, 1
      %s108 = scalar_select %p105, %s106, %s107
      %p111 = pneg %p105
      %p112 = scmp.eq.s32.totalorder %s30, 1
      %p113 = por %p111, %p112
      %p114 = scmp.ne.s32.totalorder %s106, %s109
      %p115 = scmp.eq.s32.totalorder %s30, 0
      %p116 = por %p114, %p115
      %p117 = scmp.ne.s32.totalorder %s106, %s109
      %p118 = scmp.eq.s32.totalorder %s35, 1
      %p119 = por %p117, %p118
      %p120 = scmp.ne.s32.totalorder %s109, %s110
      %p121 = scmp.eq.s32.totalorder %s35, 0
      %p122 = por %p120, %p121
      %p123 = scmp.ne.s32.totalorder %s109, %s110
      %p124 = scmp.eq.s32.totalorder %s36, 1
      %p125 = por %p123, %p124
      %p127 = scmp.ne.s32.totalorder %s110, %s126
      %p128 = scmp.eq.s32.totalorder %s36, 0
      %p129 = por %p127, %p128
      %s131 = sadd.s32 %s130, 1
      %p134 = scmp.eq.s32.totalorder %s30, 1
      %p135 = scmp.ne.s32.totalorder %s130, %s132
      %p136 = scmp.eq.s32.totalorder %s30, 0
      %p137 = por %p135, %p136
      %p138 = scmp.ne.s32.totalorder %s130, %s132
      %p139 = scmp.eq.s32.totalorder %s35, 1
      %p140 = por %p138, %p139
      %p141 = scmp.ne.s32.totalorder %s132, %s133
      %p142 = scmp.eq.s32.totalorder %s35, 0
      %p143 = por %p141, %p142
      %p144 = scmp.ne.s32.totalorder %s132, %s133
      %p145 = scmp.eq.s32.totalorder %s36, 1
      %p146 = por %p144, %p145
      %p148 = scmp.ne.s32.totalorder %s133, %s147
      %p149 = scmp.eq.s32.totalorder %s36, 0
      %p150 = por %p148, %p149
      %s152 = sadd.s32 %s151, 1
      %p155 = scmp.eq.s32.totalorder %s30, 1
      %p156 = scmp.ne.s32.totalorder %s151, %s153
      %p157 = scmp.eq.s32.totalorder %s30, 0
      %p158 = por %p156, %p157
      %p159 = scmp.ne.s32.totalorder %s151, %s153
      %p160 = scmp.eq.s32.totalorder %s35, 1
      %p161 = por %p159, %p160
      %p162 = scmp.ne.s32.totalorder %s153, %s154
      %p163 = scmp.eq.s32.totalorder %s35, 0
      %p164 = por %p162, %p163
      %p165 = scmp.ne.s32.totalorder %s153, %s154
      %p166 = scmp.eq.s32.totalorder %s36, 1
      %p167 = por %p165, %p166
      %p169 = scmp.ne.s32.totalorder %s154, %s168
      %p170 = scmp.eq.s32.totalorder %s36, 0
      %p171 = por %p169, %p170
      %s173 = sadd.s32 %s172, 1
      %p176 = scmp.eq.s32.totalorder %s30, 1
      %p177 = scmp.ne.s32.totalorder %s172, %s174
      %p178 = scmp.eq.s32.totalorder %s30, 0
      %p179 = por %p177, %p178
      %p180 = scmp.ne.s32.totalorder %s172, %s174
      %p181 = scmp.eq.s32.totalorder %s35, 1
      %p182 = por %p180, %p181
      %p183 = scmp.ne.s32.totalorder %s174, %s175
      %p184 = scmp.eq.s32.totalorder %s35, 0
      %p185 = por %p183, %p184
      %p186 = scmp.ne.s32.totalorder %s174, %s175
      %p187 = scmp.eq.s32.totalorder %s36, 1
      %p188 = por %p186, %p187
      %p190 = scmp.ne.s32.totalorder %s175, %s189
      %p191 = scmp.eq.s32.totalorder %s36, 0
      %p192 = por %p190, %p191
      %s194 = sadd.s32 %s193, 1
      %p197 = scmp.eq.s32.totalorder %s30, 1
      %p198 = scmp.ne.s32.totalorder %s193, %s195
      %p199 = scmp.eq.s32.totalorder %s30, 0
      %p200 = por %p198, %p199
      %p201 = scmp.ne.s32.totalorder %s193, %s195
      %p202 = scmp.eq.s32.totalorder %s35, 1
      %p203 = por %p201, %p202
      %p204 = scmp.ne.s32.totalorder %s195, %s196
      %p205 = scmp.eq.s32.totalorder %s35, 0
      %p206 = por %p204, %p205
      %p207 = scmp.ne.s32.totalorder %s195, %s196
      %p208 = scmp.eq.s32.totalorder %s36, 1
      %p209 = por %p207, %p208
      %p211 = scmp.ne.s32.totalorder %s196, %s210
      %p212 = scmp.eq.s32.totalorder %s36, 0
      %p213 = por %p211, %p212
      %s215 = sadd.s32 %s214, 1
      %p218 = scmp.eq.s32.totalorder %s30, 1
      %p219 = scmp.ne.s32.totalorder %s214, %s216
      %p220 = scmp.eq.s32.totalorder %s30, 0
      %p221 = por %p219, %p220
      %p222 = scmp.ne.s32.totalorder %s214, %s216
      %p223 = scmp.eq.s32.totalorder %s35, 1
      %p224 = por %p222, %p223
      %p225 = scmp.ne.s32.totalorder %s216, %s217
      %p226 = scmp.eq.s32.totalorder %s35, 0
      %p227 = por %p225, %p226
      %p228 = scmp.ne.s32.totalorder %s216, %s217
      %p229 = scmp.eq.s32.totalorder %s36, 1
      %p230 = por %p228, %p229
      %p232 = scmp.ne.s32.totalorder %s217, %s231
      %p233 = scmp.eq.s32.totalorder %s36, 0
      %p234 = por %p232, %p233
      %s236 = sadd.s32 %s235, 1
      %p239 = scmp.eq.s32.totalorder %s30, 1
      %p240 = scmp.ne.s32.totalorder %s235, %s237
      %p241 = scmp.eq.s32.totalorder %s30, 0
      %p242 = por %p240, %p241
      %p243 = scmp.ne.s32.totalorder %s235, %s237
      %p244 = scmp.eq.s32.totalorder %s35, 1
      %p245 = por %p243, %p244
      %p246 = scmp.ne.s32.totalorder %s237, %s238
      %p247 = scmp.eq.s32.totalorder %s35, 0
      %p248 = por %p246, %p247
      %p249 = scmp.ne.s32.totalorder %s237, %s238
      %p250 = scmp.eq.s32.totalorder %s36, 1
      %p251 = por %p249, %p250
      %p253 = scmp.ne.s32.totalorder %s238, %s252
      %p254 = scmp.eq.s32.totalorder %s36, 0
      %p255 = por %p253, %p254
      %s257 = sadd.s32 %s256, 1
      %p260 = scmp.eq.s32.totalorder %s30, 1
      %p261 = scmp.ne.s32.totalorder %s256, %s258
      %p262 = scmp.eq.s32.totalorder %s30, 0
      %p263 = por %p261, %p262
      %p264 = scmp.ne.s32.totalorder %s256, %s258
      %p265 = scmp.eq.s32.totalorder %s35, 1
      %p266 = por %p264, %p265
      %p267 = scmp.ne.s32.totalorder %s258, %s259
      %p268 = scmp.eq.s32.totalorder %s35, 0
      %p269 = por %p267, %p268
      %p270 = scmp.ne.s32.totalorder %s258, %s259
      %p271 = scmp.eq.s32.totalorder %s36, 1
      %p272 = por %p270, %p271
      %p274 = scmp.ne.s32.totalorder %s259, %s273
      %p275 = scmp.eq.s32.totalorder %s36, 0
      %p276 = por %p274, %p275
      %s278 = sadd.s32 %s277, 1
      %p281 = scmp.eq.s32.totalorder %s30, 1
      %p282 = scmp.ne.s32.totalorder %s277, %s279
      %p283 = scmp.eq.s32.totalorder %s30, 0
      %p284 = por %p282, %p283
      %p285 = scmp.ne.s32.totalorder %s277, %s279
      %p286 = scmp.eq.s32.totalorder %s35, 1
      %p287 = por %p285, %p286
      %p288 = scmp.ne.s32.totalorder %s279, %s280
      %p289 = scmp.eq.s32.totalorder %s35, 0
      %p290 = por %p288, %p289
      %p291 = scmp.ne.s32.totalorder %s279, %s280
      %p292 = scmp.eq.s32.totalorder %s36, 1
      %p293 = por %p291, %p292
      %p295 = scmp.ne.s32.totalorder %s280, %s294
      %p296 = scmp.eq.s32.totalorder %s36, 0
      %p297 = por %p295, %p296
      %s299 = sadd.s32 %s298, 1
      %p302 = scmp.eq.s32.totalorder %s30, 1
      %p303 = scmp.ne.s32.totalorder %s298, %s300
      %p304 = scmp.eq.s32.totalorder %s30, 0
      %p305 = por %p303, %p304
      %p306 = scmp.ne.s32.totalorder %s298, %s300
      %p307 = scmp.eq.s32.totalorder %s35, 1
      %p308 = por %p306, %p307
      %p309 = scmp.ne.s32.totalorder %s300, %s301
      %p310 = scmp.eq.s32.totalorder %s35, 0
      %p311 = por %p309, %p310
      %p312 = scmp.ne.s32.totalorder %s300, %s301
      %p313 = scmp.eq.s32.totalorder %s36, 1
      %p314 = por %p312, %p313
      %p316 = scmp.ne.s32.totalorder %s301, %s315
      %p317 = scmp.eq.s32.totalorder %s36, 0
      %p318 = por %p316, %p317
      %s320 = sadd.s32 %s319, 1
      %p323 = scmp.eq.s32.totalorder %s30, 1
      %p324 = scmp.ne.s32.totalorder %s319, %s321
      %p325 = scmp.eq.s32.totalorder %s30, 0
      %p326 = por %p324, %p325
      %p327 = scmp.ne.s32.totalorder %s319, %s321
      %p328 = scmp.eq.s32.totalorder %s35, 1
      %p329 = por %p327, %p328
      %p330 = scmp.ne.s32.totalorder %s321, %s322
      %p331 = scmp.eq.s32.totalorder %s35, 0
      %p332 = por %p330, %p331
      %p333 = scmp.ne.s32.totalorder %s321, %s322
      %p334 = scmp.eq.s32.totalorder %s36, 1
      %p335 = por %p333, %p334
      %p337 = scmp.ne.s32.totalorder %s322, %s336
      %p338 = scmp.eq.s32.totalorder %s36, 0
      %p339 = por %p337, %p338
      %s341 = sadd.s32 %s340, 1
      %p344 = scmp.eq.s32.totalorder %s30, 1
      %p345 = scmp.ne.s32.totalorder %s340, %s342
      %p346 = scmp.eq.s32.totalorder %s30, 0
      %p347 = por %p345, %p346
      %p348 = scmp.ne.s32.totalorder %s340, %s342
      %p349 = scmp.eq.s32.totalorder %s35, 1
      %p350 = por %p348, %p349
      %p351 = scmp.ne.s32.totalorder %s342, %s343
      %p352 = scmp.eq.s32.totalorder %s35, 0
      %p353 = por %p351, %p352
      %p354 = scmp.ne.s32.totalorder %s342, %s343
      %p355 = scmp.eq.s32.totalorder %s36, 1
      %p356 = por %p354, %p355
      %p358 = scmp.ne.s32.totalorder %s343, %s357
      %p359 = scmp.eq.s32.totalorder %s36, 0
      %p360 = por %p358, %p359
      %s362 = sadd.s32 %s361, 1
      %p365 = scmp.eq.s32.totalorder %s30, 1
      %p366 = scmp.ne.s32.totalorder %s361, %s363
      %p367 = scmp.eq.s32.totalorder %s30, 0
      %p368 = por %p366, %p367
      %p369 = scmp.ne.s32.totalorder %s361, %s363
      %p370 = scmp.eq.s32.totalorder %s35, 1
      %p371 = por %p369, %p370
      %p372 = scmp.ne.s32.totalorder %s363, %s364
      %p373 = scmp.eq.s32.totalorder %s35, 0
      %p374 = por %p372, %p373
      %p375 = scmp.ne.s32.totalorder %s363, %s364
      %p376 = scmp.eq.s32.totalorder %s36, 1
      %p377 = por %p375, %p376
      %p379 = scmp.ne.s32.totalorder %s364, %s378
      %p380 = scmp.eq.s32.totalorder %s36, 0
      %p381 = por %p379, %p380
      %s383 = sadd.s32 %s382, 1
      %p386 = scmp.eq.s32.totalorder %s30, 1
      %p387 = scmp.ne.s32.totalorder %s382, %s384
      %p388 = scmp.eq.s32.totalorder %s30, 0
      %p389 = por %p387, %p388
      %p390 = scmp.ne.s32.totalorder %s382, %s384
      %p391 = scmp.eq.s32.totalorder %s35, 1
      %p392 = por %p390, %p391
      %p393 = scmp.ne.s32.totalorder %s384, %s385
      %p394 = scmp.eq.s32.totalorder %s35, 0
      %p395 = por %p393, %p394
      %p396 = scmp.ne.s32.totalorder %s384, %s385
      %p397 = scmp.eq.s32.totalorder %s36, 1
      %p398 = por %p396, %p397
      %p400 = scmp.ne.s32.totalorder %s385, %s399
      %p401 = scmp.eq.s32.totalorder %s36, 0
      %p402 = por %p400, %p401
      %s404 = sadd.s32 %s403, 1
      %p407 = scmp.eq.s32.totalorder %s30, 1
      %p408 = scmp.ne.s32.totalorder %s403, %s405
      %p409 = scmp.eq.s32.totalorder %s30, 0
      %p410 = por %p408, %p409
      %p411 = scmp.ne.s32.totalorder %s403, %s405
      %p412 = scmp.eq.s32.totalorder %s35, 1
      %p413 = por %p411, %p412
      %p414 = scmp.ne.s32.totalorder %s405, %s406
      %p415 = scmp.eq.s32.totalorder %s35, 0
      %p416 = por %p414, %p415
      %p417 = scmp.ne.s32.totalorder %s405, %s406
      %p418 = scmp.eq.s32.totalorder %s36, 1
      %p419 = por %p417, %p418
      %p421 = scmp.ne.s32.totalorder %s406, %s420
      %p422 = scmp.eq.s32.totalorder %s36, 0
      %p423 = por %p421, %p422
      %s424 = ssub.s32 %s37, %s49
      %s425 = ssub.s32 %s38, %s45
      %s426 = sor.u32 %s424, %s425
      %p427 = scmp.eq.s32.totalorder %s426, 0
      %s429 = sadd.s32 %s428, 1
      %s430 = scalar_select %p427, %s428, %s429
      %p433 = pneg %p427
      %p434 = scmp.eq.s32.totalorder %s30, 1
      %p435 = por %p433, %p434
      %p436 = scmp.ne.s32.totalorder %s428, %s431
      %p437 = scmp.eq.s32.totalorder %s30, 0
      %p438 = por %p436, %p437
      %p439 = scmp.ne.s32.totalorder %s428, %s431
      %p440 = scmp.eq.s32.totalorder %s35, 1
      %p441 = por %p439, %p440
      %p442 = scmp.ne.s32.totalorder %s431, %s432
      %p443 = scmp.eq.s32.totalorder %s35, 0
      %p444 = por %p442, %p443
      %p445 = scmp.ne.s32.totalorder %s431, %s432
      %p446 = scmp.eq.s32.totalorder %s36, 1
      %p447 = por %p445, %p446
      %p449 = scmp.ne.s32.totalorder %s432, %s448
      %p450 = scmp.eq.s32.totalorder %s36, 0
      %p451 = por %p449, %p450
      %p452 = scmp.le.s32.totalorder 1, %s30
      %p453 = scmp.lt.s32.totalorder %s30, 3
      %p454 = pnand %p452, %p453
      %p455 = pneg %p454
      // Predicated region
      $region9: #{tpu_custom_call.1} parent=5 // pred_check
        _
      $region10: #{tpu_custom_call.1} parent=5 // pred_check_branch
        %457 = sbr.rel (%p454) target = $region12
      $region11: #{tpu_custom_call.1} parent=5 // pred_region
        %s458 = ssub.s32 %s30, 1
        // Predicated region
        $region13: #{tpu_custom_call.1} parent=11 // pred_check
          %p459 = pneg %p143
        $region14: #{tpu_custom_call.1} parent=11 // pred_check_branch
          %461 = sbr.rel (%p459) target = $region16
        $region15: #{tpu_custom_call.1} parent=11 // pred_region
          _
        $region16: #{tpu_custom_call.1} parent=11 // pred_fallthru
          _
        // Predicated region
        $region17: #{tpu_custom_call.1} parent=11 // pred_check
          %p462 = pneg %p164
        $region18: #{tpu_custom_call.1} parent=11 // pred_check_branch
          %464 = sbr.rel (%p462) target = $region20
        $region19: #{tpu_custom_call.1} parent=11 // pred_region
          %s466 = ssub.s32 16, 16
          %467 = vsyncadd [#allocation3], %s466
          %s469 = sshll.u32 [#allocation2], 4
          %s470 = int_to_ptr.vmem [resolvable:$true] %s469
          %472 = dma.hbm_to_vmem [thread:$0]  %s4, 16, %s470, [#allocation3]
        $region20: #{tpu_custom_call.1} parent=11 // pred_fallthru
          _
        // Predicated region
        $region21: #{tpu_custom_call.1} parent=11 // pred_check
          %p473 = pneg %p185
        $region22: #{tpu_custom_call.1} parent=11 // pred_check_branch
          %475 = sbr.rel (%p473) target = $region24
        $region23: #{tpu_custom_call.1} parent=11 // pred_region
          %s477 = ssub.s32 256, 256
          %478 = vsyncadd [#allocation6], %s477
          %s479 = sshll.u32 [#allocation5], 4
          %s480 = int_to_ptr.vmem [resolvable:$true] %s479
          %485 = dma.hbm_to_vmem [thread:$0]  %s5, 256, %s480, [#allocation6], 64, 64, 4
        $region24: #{tpu_custom_call.1} parent=11 // pred_fallthru
          _
        // Predicated region
        $region25: #{tpu_custom_call.1} parent=11 // pred_check
          %p486 = pneg %p206
        $region26: #{tpu_custom_call.1} parent=11 // pred_check_branch
          %488 = sbr.rel (%p486) target = $region28
        $region27: #{tpu_custom_call.1} parent=11 // pred_region
          %s490 = ssub.s32 16, 16
          %491 = vsyncadd [#allocation6], %s490
          %s493 = sshll.u32 [#allocation7], 4
          %s494 = int_to_ptr.vmem [resolvable:$true] %s493
          %496 = dma.hbm_to_vmem [thread:$0]  %s6, 16, %s494, [#allocation6]
        $region28: #{tpu_custom_call.1} parent=11 // pred_fallthru
          _
        // Predicated region
        $region29: #{tpu_custom_call.1} parent=11 // pred_check
          %p497 = pneg %p227
        $region30: #{tpu_custom_call.1} parent=11 // pred_check_branch
          %499 = sbr.rel (%p497) target = $region32
        $region31: #{tpu_custom_call.1} parent=11 // pred_region
          %s501 = ssub.s32 256, 256
          %502 = vsyncadd [#allocation9], %s501
          %s503 = sshll.u32 [#allocation8], 4
          %s504 = int_to_ptr.vmem [resolvable:$true] %s503
          %509 = dma.hbm_to_vmem [thread:$0]  %s7, 256, %s504, [#allocation9], 64, 64, 4
        $region32: #{tpu_custom_call.1} parent=11 // pred_fallthru
          _
        // Predicated region
        $region33: #{tpu_custom_call.1} parent=11 // pred_check
          %p510 = pneg %p248
        $region34: #{tpu_custom_call.1} parent=11 // pred_check_branch
          %512 = sbr.rel (%p510) target = $region36
        $region35: #{tpu_custom_call.1} parent=11 // pred_region
          %s514 = ssub.s32 16, 16
          %515 = vsyncadd [#allocation9], %s514
          %s517 = sshll.u32 [#allocation10], 4
          %s518 = int_to_ptr.vmem [resolvable:$true] %s517
          %520 = dma.hbm_to_vmem [thread:$0]  %s8, 16, %s518, [#allocation9]
        $region36: #{tpu_custom_call.1} parent=11 // pred_fallthru
          _
        // Predicated region
        $region37: #{tpu_custom_call.1} parent=11 // pred_check
          %p521 = pneg %p269
        $region38: #{tpu_custom_call.1} parent=11 // pred_check_branch
          %523 = sbr.rel (%p521) target = $region40
        $region39: #{tpu_custom_call.1} parent=11 // pred_region
          %s525 = ssub.s32 16, 16
          %526 = vsyncadd [#allocation12], %s525
          %s528 = sshll.u32 [#allocation11], 4
          %s529 = int_to_ptr.vmem [resolvable:$true] %s528
          %531 = dma.hbm_to_vmem [thread:$0]  %s9, 16, %s529, [#allocation12]
        $region40: #{tpu_custom_call.1} parent=11 // pred_fallthru
          _
        // Predicated region
        $region41: #{tpu_custom_call.1} parent=11 // pred_check
          %p532 = pneg %p290
        $region42: #{tpu_custom_call.1} parent=11 // pred_check_branch
          %534 = sbr.rel (%p532) target = $region44
        $region43: #{tpu_custom_call.1} parent=11 // pred_region
          _
        $region44: #{tpu_custom_call.1} parent=11 // pred_fallthru
          _
        // Predicated region
        $region45: #{tpu_custom_call.1} parent=11 // pred_check
          %p535 = pneg %p311
        $region46: #{tpu_custom_call.1} parent=11 // pred_check_branch
          %537 = sbr.rel (%p535) target = $region48
        $region47: #{tpu_custom_call.1} parent=11 // pred_region
          _
        $region48: #{tpu_custom_call.1} parent=11 // pred_fallthru
          _
        // Predicated region
        $region49: #{tpu_custom_call.1} parent=11 // pred_check
          %p538 = pneg %p332
        $region50: #{tpu_custom_call.1} parent=11 // pred_check_branch
          %540 = sbr.rel (%p538) target = $region52
        $region51: #{tpu_custom_call.1} parent=11 // pred_region
          _
        $region52: #{tpu_custom_call.1} parent=11 // pred_fallthru
          _
        // Predicated region
        $region53: #{tpu_custom_call.1} parent=11 // pred_check
          %p541 = pneg %p353
        $region54: #{tpu_custom_call.1} parent=11 // pred_check_branch
          %543 = sbr.rel (%p541) target = $region56
        $region55: #{tpu_custom_call.1} parent=11 // pred_region
          _
        $region56: #{tpu_custom_call.1} parent=11 // pred_fallthru
          _
        // Predicated region
        $region57: #{tpu_custom_call.1} parent=11 // pred_check
          %p544 = pneg %p374
        $region58: #{tpu_custom_call.1} parent=11 // pred_check_branch
          %546 = sbr.rel (%p544) target = $region60
        $region59: #{tpu_custom_call.1} parent=11 // pred_region
          _
        $region60: #{tpu_custom_call.1} parent=11 // pred_fallthru
          _
        // Predicated region
        $region61: #{tpu_custom_call.1} parent=11 // pred_check
          %p547 = pneg %p395
        $region62: #{tpu_custom_call.1} parent=11 // pred_check_branch
          %549 = sbr.rel (%p547) target = $region64
        $region63: #{tpu_custom_call.1} parent=11 // pred_region
          _
        $region64: #{tpu_custom_call.1} parent=11 // pred_fallthru
          _
        // Predicated region
        $region65: #{tpu_custom_call.1} parent=11 // pred_check
          %p550 = pneg %p416
        $region66: #{tpu_custom_call.1} parent=11 // pred_check_branch
          %552 = sbr.rel (%p550) target = $region68
        $region67: #{tpu_custom_call.1} parent=11 // pred_region
          _
        $region68: #{tpu_custom_call.1} parent=11 // pred_fallthru
          _
      $region12: #{tpu_custom_call.1} parent=5 // pred_fallthru
        _
      %p553 = scmp.lt.s32.totalorder %s30, 2
      // Predicated region
      $region69: #{tpu_custom_call.1} parent=5 // pred_check
        %p554 = pneg %p553
      $region70: #{tpu_custom_call.1} parent=5 // pred_check_branch
        %556 = sbr.rel (%p554) target = $region72
      $region71: #{tpu_custom_call.1} parent=5 // pred_region
        // Predicated region
        $region73: #{tpu_custom_call.1} parent=71 // pred_check
          %p557 = pneg %p64
        $region74: #{tpu_custom_call.1} parent=71 // pred_check_branch
          %559 = sbr.rel (%p557) target = $region76
        $region75: #{tpu_custom_call.1} parent=71 // pred_region
          %p560 = scmp.lt.s32.totalorder %s37, 1
          %s561 = scalar_select %p560, %s37, 1
          %p562 = scmp.lt.s32.totalorder %s38, 0
          %s563 = scalar_select %p562, %s38, 0
          %s564 = sadd.s32 %s563, %s561
          %s565 = smul.addr %s564, 8
          %s566 = scalar_lea.vmem %s0, %s565
        $region76: #{tpu_custom_call.1} parent=71 // pred_fallthru
          _
        // Predicated region
        $region77: #{tpu_custom_call.1} parent=71 // pred_check
          %p567 = pneg %p90
        $region78: #{tpu_custom_call.1} parent=71 // pred_check_branch
          %569 = sbr.rel (%p567) target = $region80
        $region79: #{tpu_custom_call.1} parent=71 // pred_region
          %p570 = scmp.lt.s32.totalorder %s37, 1
          %s571 = scalar_select %p570, %s37, 1
          %s572 = smul.addr %s571, 8
          %s573 = scalar_lea.vmem %s1, %s572
        $region80: #{tpu_custom_call.1} parent=71 // pred_fallthru
          _
        // Predicated region
        $region81: #{tpu_custom_call.1} parent=71 // pred_check
          %p574 = pneg %p116
        $region82: #{tpu_custom_call.1} parent=71 // pred_check_branch
          %576 = sbr.rel (%p574) target = $region84
        $region83: #{tpu_custom_call.1} parent=71 // pred_region
          %p577 = scmp.lt.s32.totalorder %s37, 1
          %s578 = scalar_select %p577, %s37, 1
          %s579 = scalar_lea.vmem %s2, %s578
        $region84: #{tpu_custom_call.1} parent=71 // pred_fallthru
          _
      $region72: #{tpu_custom_call.1} parent=5 // pred_fallthru
        _
      %p580 = scmp.le.s32.totalorder 1, %s30
      %p581 = scmp.lt.s32.totalorder %s30, 3
      %p582 = pnand %p580, %p581
      %p583 = pneg %p582
      // Predicated region
      $region85: #{tpu_custom_call.1} parent=5 // pred_check
        _
      $region86: #{tpu_custom_call.1} parent=5 // pred_check_branch
        %585 = sbr.rel (%p582) target = $region88
      $region87: #{tpu_custom_call.1} parent=5 // pred_region
        %s586 = ssub.s32 %s30, 1
        // Predicated region
        $region89: #{tpu_custom_call.1} parent=87 // pred_check
          %p587 = pneg %p164
        $region90: #{tpu_custom_call.1} parent=87 // pred_check_branch
          %589 = sbr.rel (%p587) target = $region92
        $region91: #{tpu_custom_call.1} parent=87 // pred_region
          %590 = dma.done [#allocation3], 16
        $region92: #{tpu_custom_call.1} parent=87 // pred_fallthru
          _
        // Predicated region
        $region93: #{tpu_custom_call.1} parent=87 // pred_check
          %p591 = pneg %p185
        $region94: #{tpu_custom_call.1} parent=87 // pred_check_branch
          %593 = sbr.rel (%p591) target = $region96
        $region95: #{tpu_custom_call.1} parent=87 // pred_region
          %594 = dma.done [#allocation6], 256
        $region96: #{tpu_custom_call.1} parent=87 // pred_fallthru
          _
        // Predicated region
        $region97: #{tpu_custom_call.1} parent=87 // pred_check
          %p595 = pneg %p206
        $region98: #{tpu_custom_call.1} parent=87 // pred_check_branch
          %597 = sbr.rel (%p595) target = $region100
        $region99: #{tpu_custom_call.1} parent=87 // pred_region
          %598 = dma.done [#allocation6], 16
        $region100: #{tpu_custom_call.1} parent=87 // pred_fallthru
          _
        // Predicated region
        $region101: #{tpu_custom_call.1} parent=87 // pred_check
          %p599 = pneg %p227
        $region102: #{tpu_custom_call.1} parent=87 // pred_check_branch
          %601 = sbr.rel (%p599) target = $region104
        $region103: #{tpu_custom_call.1} parent=87 // pred_region
          %602 = dma.done [#allocation9], 256
        $region104: #{tpu_custom_call.1} parent=87 // pred_fallthru
          _
        // Predicated region
        $region105: #{tpu_custom_call.1} parent=87 // pred_check
          %p603 = pneg %p248
        $region106: #{tpu_custom_call.1} parent=87 // pred_check_branch
          %605 = sbr.rel (%p603) target = $region108
        $region107: #{tpu_custom_call.1} parent=87 // pred_region
          %606 = dma.done [#allocation9], 16
        $region108: #{tpu_custom_call.1} parent=87 // pred_fallthru
          _
        // Predicated region
        $region109: #{tpu_custom_call.1} parent=87 // pred_check
          %p607 = pneg %p269
        $region110: #{tpu_custom_call.1} parent=87 // pred_check_branch
          %609 = sbr.rel (%p607) target = $region112
        $region111: #{tpu_custom_call.1} parent=87 // pred_region
          %610 = dma.done [#allocation12], 16
        $region112: #{tpu_custom_call.1} parent=87 // pred_fallthru
          _
        %p611 = scmp.lt.s32.totalorder %s39, 1
        %s612 = scalar_select %p611, %s39, 1
        %p613 = scmp.lt.s32.totalorder %s40, 0
        %s614 = scalar_select %p613, %s40, 0
        %s615 = sadd.s32 %s614, %s612
        %s616 = smul.addr %s615, 8
        %s617 = scalar_lea.vmem %s0, %s616
        %p618 = pneg %p70
        %p619 = pneg %p67
        %p620 = scmp.lt.s32.totalorder %s39, 1
        %s621 = scalar_select %p620, %s39, 1
        %s622 = smul.addr %s621, 8
        %s623 = scalar_lea.vmem %s1, %s622
        %p624 = pneg %p96
        %p625 = pneg %p93
        %p626 = scmp.lt.s32.totalorder %s39, 1
        %s627 = scalar_select %p626, %s39, 1
        %s628 = scalar_lea.vmem %s2, %s627
        %p629 = pneg %p122
        %p630 = pneg %p119
        %p631 = pneg %p143
        %p632 = pneg %p140
        %p633 = pneg %p164
        %p634 = pneg %p161
        %p635 = pneg %p185
        %p636 = pneg %p182
        %p637 = pneg %p206
        %p638 = pneg %p203
        %p639 = pneg %p227
        %p640 = pneg %p224
        %p641 = pneg %p248
        %p642 = pneg %p245
        %p643 = pneg %p269
        %p644 = pneg %p266
        %p645 = pneg %p290
        %p646 = pneg %p287
        %p647 = pneg %p311
        %p648 = pneg %p308
        %p649 = pneg %p332
        %p650 = pneg %p329
        %p651 = pneg %p353
        %p652 = pneg %p350
        %p653 = pneg %p374
        %p654 = pneg %p371
        %p655 = pneg %p395
        %p656 = pneg %p392
        %p657 = pneg %p416
        %p658 = pneg %p413
        %p659 = pneg %p444
        %p660 = pneg %p441
        %s661 = sand.u32 %s431, 1
        %s662 = scalar_lea.sflag [#allocation4], %s661
        %s663 = sand.u32 %s431, 1
        %s664 = smul.addr %s663, 8
        %s665 = scalar_lea.vmem [#allocation13], %s664
        %p666 = scmp.lt.s32.totalorder %s39, 1
        %s667 = scalar_select %p666, %s39, 1
        %p668 = scmp.lt.s32.totalorder %s40, 0
        %s669 = scalar_select %p668, %s40, 0
        %s670 = sadd.s32 %s669, %s667
        %s671 = smul.addr %s670, 8
        %s672 = scalar_lea.vmem %s0, %s671
        %p673 = scmp.lt.s32.totalorder %s39, 1
        %s674 = scalar_select %p673, %s39, 1
        %s675 = smul.addr %s674, 8
        %s676 = scalar_lea.vmem %s1, %s675
        %p677 = scmp.lt.s32.totalorder %s39, 1
        %s678 = scalar_select %p677, %s39, 1
        %s679 = scalar_lea.vmem %s2, %s678
        %v681 = vld [vmem:[%s672] sm:$0xff]
        %v682 = vld [vmem:[%s676] sm:$0xff]
        %v683 = vld [vmem:[%s679] sm:$0x1]
        %v684 = vpack.c.bf16 %v681, %v681
        %v685 = vpack.c.bf16 %v682, %v682
        %v686 = vld [vmem:[%s3] sm:$0xf]
        %v687 = vld [vmem:[%s3 + $0x4] sm:$0xf]
        %v688 = vld [vmem:[%s3 + $0x8] sm:$0xf]
        %v689 = vld [vmem:[%s3 + $0xc] sm:$0xf]
        %v690 = vld [vmem:[#allocation2] sm:$0x1]
        %v692 = vlaneseq
        %v693 = vshrl.u32 %v692, 7
        %v694 = vsub.s32 0, %v693
        %v695 = vrot.slane %v690, %v694
        %v701 = vunpack.c.l.b16 %v686
        %v702 = vunpack.c.l.b16 %v687
        %v703 = vunpack.c.l.b16 %v688
        %v704 = vunpack.c.l.b16 %v689
        %v705 = vpack.c.b16 %v702, %v701
        %v706 = vpack.c.b16 %v704, %v703
        %vm709 = vcmask 261120
        %v711 = vsel %vm709, %v684, 0
        %713 = vmatprep.subr.bf16.mxu0 0
        %714 = vmatpush1.bf16.msra.mxu0 %v705
        %715 = vmatprep.subr.bf16.mxu0 0
        %716 = vmatpush1.bf16.msra.mxu0 %v706
        %717 = vmatprep.subr.bf16.mxu0 0
        %718 = vmatpush1.bf16.msra.mxu0 0
        %719 = vmatprep.subr.bf16.mxu0 0
        %720 = vmatpush1.bf16.msra.mxu0 0
        %721 = vmatprep.subr.bf16.mxu0 0
        %722 = vmatpush1.bf16.msra.mxu0 0
        %723 = vmatprep.subr.bf16.mxu0 0
        %724 = vmatpush1.bf16.msra.mxu0 0
        %725 = vmatprep.subr.bf16.mxu0 0
        %726 = vmatpush1.bf16.msra.mxu0 0
        %727 = vmatprep.subr.bf16.mxu0 0
        %728 = vmatpush1.bf16.msra.mxu0 0
        %729 = vmatprep.subr.bf16.mxu0 0
        %730 = vmatpush1.bf16.msra.mxu0 0
        %731 = vmatprep.subr.bf16.mxu0 0
        %732 = vmatpush1.bf16.msra.mxu0 0
        %733 = vmatprep.subr.bf16.mxu0 0
        %734 = vmatpush1.bf16.msra.mxu0 0
        %735 = vmatprep.subr.bf16.mxu0 0
        %736 = vmatpush1.bf16.msra.mxu0 0
        %737 = vmatprep.subr.bf16.mxu0 0
        %738 = vmatpush1.bf16.msra.mxu0 0
        %739 = vmatprep.subr.bf16.mxu0 0
        %740 = vmatpush1.bf16.msra.mxu0 0
        %741 = vmatprep.subr.bf16.mxu0 0
        %742 = vmatpush1.bf16.msra.mxu0 0
        %743 = vmatprep.subr.bf16.mxu0 0
        %744 = vmatpush1.bf16.msra.mxu0 0
        %745 = vmatprep.mubr.bf16.mxu0 0
        %746 = vmatmul.mubr.bf16.gmra.mrb[0].mxu0 %v711
        %v747 = vpop.f32.mrb[0].mxu0
        %v748 = vadd.f32 %v695, %v747
        %v749 = vpop.f32.mrb[0].mxu0
        %v750 = vpop.f32.mrb[0].mxu0
        %v751 = vpop.f32.mrb[0].mxu0
        %752 = vdwg.mxu0
        %v753 = vld [vmem:[#allocation5] sm:$0xf]
        %v754 = vld [vmem:[#allocation5 + $0x4] sm:$0xf]
        %v755 = vld [vmem:[#allocation5 + $0x8] sm:$0xf]
        %v756 = vld [vmem:[#allocation5 + $0xc] sm:$0xf]
        %v757 = vld [vmem:[#allocation7] sm:$0x1]
        %v759 = vlaneseq
        %v760 = vshrl.u32 %v759, 7
        %v761 = vsub.s32 0, %v760
        %v762 = vrot.slane %v757, %v761
        %v768 = vunpack.c.l.b16 %v753
        %v769 = vunpack.c.l.b16 %v754
        %v770 = vunpack.c.l.b16 %v755
        %v771 = vunpack.c.l.b16 %v756
        %v772 = vpack.c.b16 %v769, %v768
        %v773 = vpack.c.b16 %v771, %v770
        %v777 = vsel %vm709, %v685, 0
        %779 = vmatprep.subr.bf16.mxu0 0
        %780 = vmatpush1.bf16.msra.mxu0 %v772
        %781 = vmatprep.subr.bf16.mxu0 0
        %782 = vmatpush1.bf16.msra.mxu0 %v773
        %783 = vmatprep.subr.bf16.mxu0 0
        %784 = vmatpush1.bf16.msra.mxu0 0
        %785 = vmatprep.subr.bf16.mxu0 0
        %786 = vmatpush1.bf16.msra.mxu0 0
        %787 = vmatprep.subr.bf16.mxu0 0
        %788 = vmatpush1.bf16.msra.mxu0 0
        %789 = vmatprep.subr.bf16.mxu0 0
        %790 = vmatpush1.bf16.msra.mxu0 0
        %791 = vmatprep.subr.bf16.mxu0 0
        %792 = vmatpush1.bf16.msra.mxu0 0
        %793 = vmatprep.subr.bf16.mxu0 0
        %794 = vmatpush1.bf16.msra.mxu0 0
        %795 = vmatprep.subr.bf16.mxu0 0
        %796 = vmatpush1.bf16.msra.mxu0 0
        %797 = vmatprep.subr.bf16.mxu0 0
        %798 = vmatpush1.bf16.msra.mxu0 0
        %799 = vmatprep.subr.bf16.mxu0 0
        %800 = vmatpush1.bf16.msra.mxu0 0
        %801 = vmatprep.subr.bf16.mxu0 0
        %802 = vmatpush1.bf16.msra.mxu0 0
        %803 = vmatprep.subr.bf16.mxu0 0
        %804 = vmatpush1.bf16.msra.mxu0 0
        %805 = vmatprep.subr.bf16.mxu0 0
        %806 = vmatpush1.bf16.msra.mxu0 0
        %807 = vmatprep.subr.bf16.mxu0 0
        %808 = vmatpush1.bf16.msra.mxu0 0
        %809 = vmatprep.subr.bf16.mxu0 0
        %810 = vmatpush1.bf16.msra.mxu0 0
        %811 = vmatprep.mubr.bf16.mxu0 0
        %812 = vmatmul.mubr.bf16.gmra.mrb[0].mxu0 %v777
        %v813 = vpop.f32.mrb[0].mxu0
        %v814 = vadd.f32 %v762, %v813
        %v815 = vpop.f32.mrb[0].mxu0
        %v816 = vpop.f32.mrb[0].mxu0
        %v817 = vpop.f32.mrb[0].mxu0
        %818 = vdwg.mxu0
        %v819 = vmul.f32 %v748, 0.35355338
        %821 = vrot.lane.b32.xlu0 %v819, 120
        %v822 = vpop.permute.xlu0 %821
        %824 = vrot.lane.b32.xlu0 %v819, 112
        %v825 = vpop.permute.xlu0 %824
        %827 = vrot.lane.b32.xlu0 %v819, 104
        %v828 = vpop.permute.xlu0 %827
        %v830 = vpack.c.bf16 %v819, %v819
        %v831 = vpack.c.bf16 %v822, %v822
        %v832 = vpack.c.bf16 %v825, %v825
        %v833 = vpack.c.bf16 %v828, %v828
        %835 = vrot.lane.b32.xlu0 %v814, 120
        %v836 = vpop.permute.xlu0 %835
        %838 = vrot.lane.b32.xlu0 %v814, 112
        %v839 = vpop.permute.xlu0 %838
        %841 = vrot.lane.b32.xlu0 %v814, 104
        %v842 = vpop.permute.xlu0 %841
        %v844 = vpack.c.bf16 %v814, %v814
        %v845 = vpack.c.bf16 %v836, %v836
        %v846 = vpack.c.bf16 %v839, %v839
        %v847 = vpack.c.bf16 %v842, %v842
        %vm848 = vcmp.eq.f32.partialorder %v683, 0.0
        %v849 = vsel %vm848, -1e+09, 0.0
        %v851 = vlaneseq
        %v852 = vshrl.u32 %v851, 7
        %v853 = vsub.s32 0, %v852
        %v854 = vrot.slane %v849, %v853
        %vm856 = vcmask 64512
        %v858 = vsel %vm856, %v830, 0
        %v861 = vsel %vm856, %v844, 0
        %863 = vmatprep.subr.bf16.mxu0 0
        %864 = vmatpush1.bf16.xpose.msra.mxu0 %v861
        %865 = vmatprep.subr.bf16.mxu0 0
        %866 = vmatpush1.bf16.xpose.msra.mxu0 0
        %867 = vmatprep.subr.bf16.mxu0 0
        %868 = vmatpush1.bf16.xpose.msra.mxu0 0
        %869 = vmatprep.subr.bf16.mxu0 0
        %870 = vmatpush1.bf16.xpose.msra.mxu0 0
        %871 = vmatprep.subr.bf16.mxu0 0
        %872 = vmatpush1.bf16.xpose.msra.mxu0 0
        %873 = vmatprep.subr.bf16.mxu0 0
        %874 = vmatpush1.bf16.xpose.msra.mxu0 0
        %875 = vmatprep.subr.bf16.mxu0 0
        %876 = vmatpush1.bf16.xpose.msra.mxu0 0
        %877 = vmatprep.subr.bf16.mxu0 0
        %878 = vmatpush1.bf16.xpose.msra.mxu0 0
        %879 = vmatprep.subr.bf16.mxu0 0
        %880 = vmatpush1.bf16.xpose.msra.mxu0 0
        %881 = vmatprep.subr.bf16.mxu0 0
        %882 = vmatpush1.bf16.xpose.msra.mxu0 0
        %883 = vmatprep.subr.bf16.mxu0 0
        %884 = vmatpush1.bf16.xpose.msra.mxu0 0
        %885 = vmatprep.subr.bf16.mxu0 0
        %886 = vmatpush1.bf16.xpose.msra.mxu0 0
        %887 = vmatprep.subr.bf16.mxu0 0
        %888 = vmatpush1.bf16.xpose.msra.mxu0 0
        %889 = vmatprep.subr.bf16.mxu0 0
        %890 = vmatpush1.bf16.xpose.msra.mxu0 0
        %891 = vmatprep.subr.bf16.mxu0 0
        %892 = vmatpush1.bf16.xpose.msra.mxu0 0
        %893 = vmatprep.subr.bf16.mxu0 0
        %894 = vmatpush1.bf16.xpose.msra.mxu0 0
        %895 = vmatprep.mubr.bf16.mxu0 0
        %896 = vmatmul.mubr.bf16.gmra.mrb[0].mxu0 %v858
        %v897 = vpop.f32.mrb[0].mxu0
        %v898 = vadd.f32 %v854, %v897
        %v899 = vpop.f32.mrb[0].mxu0
        %v900 = vpop.f32.mrb[0].mxu0
        %v901 = vpop.f32.mrb[0].mxu0
        %902 = vdwg.mxu0
        %v904 = vsel %vm856, %v831, 0
        %v907 = vsel %vm856, %v845, 0
        %909 = vmatprep.subr.bf16.mxu0 0
        %910 = vmatpush1.bf16.xpose.msra.mxu0 %v907
        %911 = vmatprep.subr.bf16.mxu0 0
        %912 = vmatpush1.bf16.xpose.msra.mxu0 0
        %913 = vmatprep.subr.bf16.mxu0 0
        %914 = vmatpush1.bf16.xpose.msra.mxu0 0
        %915 = vmatprep.subr.bf16.mxu0 0
        %916 = vmatpush1.bf16.xpose.msra.mxu0 0
        %917 = vmatprep.subr.bf16.mxu0 0
        %918 = vmatpush1.bf16.xpose.msra.mxu0 0
        %919 = vmatprep.subr.bf16.mxu0 0
        %920 = vmatpush1.bf16.xpose.msra.mxu0 0
        %921 = vmatprep.subr.bf16.mxu0 0
        %922 = vmatpush1.bf16.xpose.msra.mxu0 0
        %923 = vmatprep.subr.bf16.mxu0 0
        %924 = vmatpush1.bf16.xpose.msra.mxu0 0
        %925 = vmatprep.subr.bf16.mxu0 0
        %926 = vmatpush1.bf16.xpose.msra.mxu0 0
        %927 = vmatprep.subr.bf16.mxu0 0
        %928 = vmatpush1.bf16.xpose.msra.mxu0 0
        %929 = vmatprep.subr.bf16.mxu0 0
        %930 = vmatpush1.bf16.xpose.msra.mxu0 0
        %931 = vmatprep.subr.bf16.mxu0 0
        %932 = vmatpush1.bf16.xpose.msra.mxu0 0
        %933 = vmatprep.subr.bf16.mxu0 0
        %934 = vmatpush1.bf16.xpose.msra.mxu0 0
        %935 = vmatprep.subr.bf16.mxu0 0
        %936 = vmatpush1.bf16.xpose.msra.mxu0 0
        %937 = vmatprep.subr.bf16.mxu0 0
        %938 = vmatpush1.bf16.xpose.msra.mxu0 0
        %939 = vmatprep.subr.bf16.mxu0 0
        %940 = vmatpush1.bf16.xpose.msra.mxu0 0
        %941 = vmatprep.mubr.bf16.mxu0 0
        %942 = vmatmul.mubr.bf16.gmra.mrb[0].mxu0 %v904
        %v943 = vpop.f32.mrb[0].mxu0
        %v944 = vadd.f32 %v854, %v943
        %v945 = vpop.f32.mrb[0].mxu0
        %v946 = vpop.f32.mrb[0].mxu0
        %v947 = vpop.f32.mrb[0].mxu0
        %948 = vdwg.mxu0
        %v950 = vsel %vm856, %v832, 0
        %v953 = vsel %vm856, %v846, 0
        %955 = vmatprep.subr.bf16.mxu0 0
        %956 = vmatpush1.bf16.xpose.msra.mxu0 %v953
        %957 = vmatprep.subr.bf16.mxu0 0
        %958 = vmatpush1.bf16.xpose.msra.mxu0 0
        %959 = vmatprep.subr.bf16.mxu0 0
        %960 = vmatpush1.bf16.xpose.msra.mxu0 0
        %961 = vmatprep.subr.bf16.mxu0 0
        %962 = vmatpush1.bf16.xpose.msra.mxu0 0
        %963 = vmatprep.subr.bf16.mxu0 0
        %964 = vmatpush1.bf16.xpose.msra.mxu0 0
        %965 = vmatprep.subr.bf16.mxu0 0
        %966 = vmatpush1.bf16.xpose.msra.mxu0 0
        %967 = vmatprep.subr.bf16.mxu0 0
        %968 = vmatpush1.bf16.xpose.msra.mxu0 0
        %969 = vmatprep.subr.bf16.mxu0 0
        %970 = vmatpush1.bf16.xpose.msra.mxu0 0
        %971 = vmatprep.subr.bf16.mxu0 0
        %972 = vmatpush1.bf16.xpose.msra.mxu0 0
        %973 = vmatprep.subr.bf16.mxu0 0
        %974 = vmatpush1.bf16.xpose.msra.mxu0 0
        %975 = vmatprep.subr.bf16.mxu0 0
        %976 = vmatpush1.bf16.xpose.msra.mxu0 0
        %977 = vmatprep.subr.bf16.mxu0 0
        %978 = vmatpush1.bf16.xpose.msra.mxu0 0
        %979 = vmatprep.subr.bf16.mxu0 0
        %980 = vmatpush1.bf16.xpose.msra.mxu0 0
        %981 = vmatprep.subr.bf16.mxu0 0
        %982 = vmatpush1.bf16.xpose.msra.mxu0 0
        %983 = vmatprep.subr.bf16.mxu0 0
        %984 = vmatpush1.bf16.xpose.msra.mxu0 0
        %985 = vmatprep.subr.bf16.mxu0 0
        %986 = vmatpush1.bf16.xpose.msra.mxu0 0
        %987 = vmatprep.mubr.bf16.mxu0 0
        %988 = vmatmul.mubr.bf16.gmra.mrb[0].mxu0 %v950
        %v989 = vpop.f32.mrb[0].mxu0
        %v990 = vadd.f32 %v854, %v989
        %v991 = vpop.f32.mrb[0].mxu0
        %v992 = vpop.f32.mrb[0].mxu0
        %v993 = vpop.f32.mrb[0].mxu0
        %994 = vdwg.mxu0
        %v996 = vsel %vm856, %v833, 0
        %v999 = vsel %vm856, %v847, 0
        %1001 = vmatprep.subr.bf16.mxu0 0
        %1002 = vmatpush1.bf16.xpose.msra.mxu0 %v999
        %1003 = vmatprep.subr.bf16.mxu0 0
        %1004 = vmatpush1.bf16.xpose.msra.mxu0 0
        %1005 = vmatprep.subr.bf16.mxu0 0
        %1006 = vmatpush1.bf16.xpose.msra.mxu0 0
        %1007 = vmatprep.subr.bf16.mxu0 0
        %1008 = vmatpush1.bf16.xpose.msra.mxu0 0
        %1009 = vmatprep.subr.bf16.mxu0 0
        %1010 = vmatpush1.bf16.xpose.msra.mxu0 0
        %1011 = vmatprep.subr.bf16.mxu0 0
        %1012 = vmatpush1.bf16.xpose.msra.mxu0 0
        %1013 = vmatprep.subr.bf16.mxu0 0
        %1014 = vmatpush1.bf16.xpose.msra.mxu0 0
        %1015 = vmatprep.subr.bf16.mxu0 0
        %1016 = vmatpush1.bf16.xpose.msra.mxu0 0
        %1017 = vmatprep.subr.bf16.mxu0 0
        %1018 = vmatpush1.bf16.xpose.msra.mxu0 0
        %1019 = vmatprep.subr.bf16.mxu0 0
        %1020 = vmatpush1.bf16.xpose.msra.mxu0 0
        %1021 = vmatprep.subr.bf16.mxu0 0
        %1022 = vmatpush1.bf16.xpose.msra.mxu0 0
        %1023 = vmatprep.subr.bf16.mxu0 0
        %1024 = vmatpush1.bf16.xpose.msra.mxu0 0
        %1025 = vmatprep.subr.bf16.mxu0 0
        %1026 = vmatpush1.bf16.xpose.msra.mxu0 0
        %1027 = vmatprep.subr.bf16.mxu0 0
        %1028 = vmatpush1.bf16.xpose.msra.mxu0 0
        %1029 = vmatprep.subr.bf16.mxu0 0
        %1030 = vmatpush1.bf16.xpose.msra.mxu0 0
        %1031 = vmatprep.subr.bf16.mxu0 0
        %1032 = vmatpush1.bf16.xpose.msra.mxu0 0
        %1033 = vmatprep.mubr.bf16.mxu0 0
        %1034 = vmatmul.mubr.bf16.gmra.mrb[0].mxu0 %v996
        %v1035 = vpop.f32.mrb[0].mxu0
        %v1036 = vadd.f32 %v854, %v1035
        %v1037 = vpop.f32.mrb[0].mxu0
        %v1038 = vpop.f32.mrb[0].mxu0
        %v1039 = vpop.f32.mrb[0].mxu0
        %1040 = vdwg.mxu0
        %v1041 = vsel %vm856, %v898, -inf
        %1042 = vmax.xlane.f32.xlu0 %v1041
        %v1043 = vpop.xlane.xlu0 %1042
        %v1044 = vsel %vm856, %v944, -inf
        %1045 = vmax.xlane.f32.xlu0 %v1044
        %v1046 = vpop.xlane.xlu0 %1045
        %v1047 = vsel %vm856, %v990, -inf
        %1048 = vmax.xlane.f32.xlu0 %v1047
        %v1049 = vpop.xlane.xlu0 %1048
        %v1050 = vsel %vm856, %v1036, -inf
        %1051 = vmax.xlane.f32.xlu0 %v1050
        %v1052 = vpop.xlane.xlu0 %1051
        %v1053 = vsub.f32 %v898, %v1043
        %v1054 = vsub.f32 %v944, %v1046
        %v1055 = vsub.f32 %v990, %v1049
        %v1056 = vsub.f32 %v1036, %v1052
        %v1057 = vmul.f32 %v1053, 1.442695
        %v1058 = vpow.pop %v1057
        %v1059 = vmul.f32 %v1054, 1.442695
        %v1060 = vpow.pop %v1059
        %v1061 = vmul.f32 %v1055, 1.442695
        %v1062 = vpow.pop %v1061
        %v1063 = vmul.f32 %v1056, 1.442695
        %v1064 = vpow.pop %v1063
        %v1065 = vsel %vm856, %v1058, 0.0
        %1066 = vadd.xlane.f32.xlu0 %v1065
        %v1067 = vpop.xlane.xlu0 %1066
        %v1068 = vsel %vm856, %v1060, 0.0
        %1069 = vadd.xlane.f32.xlu0 %v1068
        %v1070 = vpop.xlane.xlu0 %1069
        %v1071 = vsel %vm856, %v1062, 0.0
        %1072 = vadd.xlane.f32.xlu0 %v1071
        %v1073 = vpop.xlane.xlu0 %1072
        %v1074 = vsel %vm856, %v1064, 0.0
        %1075 = vadd.xlane.f32.xlu0 %v1074
        %v1076 = vpop.xlane.xlu0 %1075
        %v1077 = vrcp.pop %v1067
        %v1078 = vrcp.pop %v1070
        %v1079 = vrcp.pop %v1073
        %v1080 = vrcp.pop %v1076
        %v1081 = vmul.f32 %v1058, %v1077
        %v1082 = vmul.f32 %v1060, %v1078
        %v1083 = vmul.f32 %v1062, %v1079
        %v1084 = vmul.f32 %v1064, %v1080
        %v1085 = vpack.c.bf16 %v1081, %v1081
        %v1086 = vpack.c.bf16 %v1082, %v1082
        %v1087 = vpack.c.bf16 %v1083, %v1083
        %v1088 = vpack.c.bf16 %v1084, %v1084
        %1090 = vrot.lane.b32.xlu0 %v844, 96
        %v1091 = vpop.permute.xlu0 %1090
        %v1093 = vsel %vm856, %v1085, 0
        %vm1095 = vcmask 1043456
        %v1097 = vsel %vm1095, %v1091, 0
        %1099 = vmatprep.subr.bf16.mxu0 0
        %1100 = vmatpush1.bf16.msra.mxu0 %v1097
        %1101 = vmatprep.subr.bf16.mxu0 0
        %1102 = vmatpush1.bf16.msra.mxu0 0
        %1103 = vmatprep.subr.bf16.mxu0 0
        %1104 = vmatpush1.bf16.msra.mxu0 0
        %1105 = vmatprep.subr.bf16.mxu0 0
        %1106 = vmatpush1.bf16.msra.mxu0 0
        %1107 = vmatprep.subr.bf16.mxu0 0
        %1108 = vmatpush1.bf16.msra.mxu0 0
        %1109 = vmatprep.subr.bf16.mxu0 0
        %1110 = vmatpush1.bf16.msra.mxu0 0
        %1111 = vmatprep.subr.bf16.mxu0 0
        %1112 = vmatpush1.bf16.msra.mxu0 0
        %1113 = vmatprep.subr.bf16.mxu0 0
        %1114 = vmatpush1.bf16.msra.mxu0 0
        %1115 = vmatprep.subr.bf16.mxu0 0
        %1116 = vmatpush1.bf16.msra.mxu0 0
        %1117 = vmatprep.subr.bf16.mxu0 0
        %1118 = vmatpush1.bf16.msra.mxu0 0
        %1119 = vmatprep.subr.bf16.mxu0 0
        %1120 = vmatpush1.bf16.msra.mxu0 0
        %1121 = vmatprep.subr.bf16.mxu0 0
        %1122 = vmatpush1.bf16.msra.mxu0 0
        %1123 = vmatprep.subr.bf16.mxu0 0
        %1124 = vmatpush1.bf16.msra.mxu0 0
        %1125 = vmatprep.subr.bf16.mxu0 0
        %1126 = vmatpush1.bf16.msra.mxu0 0
        %1127 = vmatprep.subr.bf16.mxu0 0
        %1128 = vmatpush1.bf16.msra.mxu0 0
        %1129 = vmatprep.subr.bf16.mxu0 0
        %1130 = vmatpush1.bf16.msra.mxu0 0
        %1131 = vmatprep.mubr.bf16.mxu0 0
        %1132 = vmatmul.mubr.bf16.gmra.mrb[0].mxu0 %v1093
        %v1133 = vpop.f32.mrb[0].mxu0
        %v1134 = vadd.f32 0.0, %v1133
        %v1135 = vpop.f32.mrb[0].mxu0
        %v1136 = vpop.f32.mrb[0].mxu0
        %v1137 = vpop.f32.mrb[0].mxu0
        %1138 = vdwg.mxu0
        %1140 = vrot.lane.b32.xlu0 %v845, 96
        %v1141 = vpop.permute.xlu0 %1140
        %v1143 = vsel %vm856, %v1086, 0
        %v1146 = vsel %vm1095, %v1141, 0
        %1148 = vmatprep.subr.bf16.mxu0 0
        %1149 = vmatpush1.bf16.msra.mxu0 %v1146
        %1150 = vmatprep.subr.bf16.mxu0 0
        %1151 = vmatpush1.bf16.msra.mxu0 0
        %1152 = vmatprep.subr.bf16.mxu0 0
        %1153 = vmatpush1.bf16.msra.mxu0 0
        %1154 = vmatprep.subr.bf16.mxu0 0
        %1155 = vmatpush1.bf16.msra.mxu0 0
        %1156 = vmatprep.subr.bf16.mxu0 0
        %1157 = vmatpush1.bf16.msra.mxu0 0
        %1158 = vmatprep.subr.bf16.mxu0 0
        %1159 = vmatpush1.bf16.msra.mxu0 0
        %1160 = vmatprep.subr.bf16.mxu0 0
        %1161 = vmatpush1.bf16.msra.mxu0 0
        %1162 = vmatprep.subr.bf16.mxu0 0
        %1163 = vmatpush1.bf16.msra.mxu0 0
        %1164 = vmatprep.subr.bf16.mxu0 0
        %1165 = vmatpush1.bf16.msra.mxu0 0
        %1166 = vmatprep.subr.bf16.mxu0 0
        %1167 = vmatpush1.bf16.msra.mxu0 0
        %1168 = vmatprep.subr.bf16.mxu0 0
        %1169 = vmatpush1.bf16.msra.mxu0 0
        %1170 = vmatprep.subr.bf16.mxu0 0
        %1171 = vmatpush1.bf16.msra.mxu0 0
        %1172 = vmatprep.subr.bf16.mxu0 0
        %1173 = vmatpush1.bf16.msra.mxu0 0
        %1174 = vmatprep.subr.bf16.mxu0 0
        %1175 = vmatpush1.bf16.msra.mxu0 0
        %1176 = vmatprep.subr.bf16.mxu0 0
        %1177 = vmatpush1.bf16.msra.mxu0 0
        %1178 = vmatprep.subr.bf16.mxu0 0
        %1179 = vmatpush1.bf16.msra.mxu0 0
        %1180 = vmatprep.mubr.bf16.mxu0 0
        %1181 = vmatmul.mubr.bf16.gmra.mrb[0].mxu0 %v1143
        %v1182 = vpop.f32.mrb[0].mxu0
        %v1183 = vadd.f32 0.0, %v1182
        %v1184 = vpop.f32.mrb[0].mxu0
        %v1185 = vpop.f32.mrb[0].mxu0
        %v1186 = vpop.f32.mrb[0].mxu0
        %1187 = vdwg.mxu0
        %1189 = vrot.lane.b32.xlu0 %v846, 96
        %v1190 = vpop.permute.xlu0 %1189
        %v1192 = vsel %vm856, %v1087, 0
        %v1195 = vsel %vm1095, %v1190, 0
        %1197 = vmatprep.subr.bf16.mxu0 0
        %1198 = vmatpush1.bf16.msra.mxu0 %v1195
        %1199 = vmatprep.subr.bf16.mxu0 0
        %1200 = vmatpush1.bf16.msra.mxu0 0
        %1201 = vmatprep.subr.bf16.mxu0 0
        %1202 = vmatpush1.bf16.msra.mxu0 0
        %1203 = vmatprep.subr.bf16.mxu0 0
        %1204 = vmatpush1.bf16.msra.mxu0 0
        %1205 = vmatprep.subr.bf16.mxu0 0
        %1206 = vmatpush1.bf16.msra.mxu0 0
        %1207 = vmatprep.subr.bf16.mxu0 0
        %1208 = vmatpush1.bf16.msra.mxu0 0
        %1209 = vmatprep.subr.bf16.mxu0 0
        %1210 = vmatpush1.bf16.msra.mxu0 0
        %1211 = vmatprep.subr.bf16.mxu0 0
        %1212 = vmatpush1.bf16.msra.mxu0 0
        %1213 = vmatprep.subr.bf16.mxu0 0
        %1214 = vmatpush1.bf16.msra.mxu0 0
        %1215 = vmatprep.subr.bf16.mxu0 0
        %1216 = vmatpush1.bf16.msra.mxu0 0
        %1217 = vmatprep.subr.bf16.mxu0 0
        %1218 = vmatpush1.bf16.msra.mxu0 0
        %1219 = vmatprep.subr.bf16.mxu0 0
        %1220 = vmatpush1.bf16.msra.mxu0 0
        %1221 = vmatprep.subr.bf16.mxu0 0
        %1222 = vmatpush1.bf16.msra.mxu0 0
        %1223 = vmatprep.subr.bf16.mxu0 0
        %1224 = vmatpush1.bf16.msra.mxu0 0
        %1225 = vmatprep.subr.bf16.mxu0 0
        %1226 = vmatpush1.bf16.msra.mxu0 0
        %1227 = vmatprep.subr.bf16.mxu0 0
        %1228 = vmatpush1.bf16.msra.mxu0 0
        %1229 = vmatprep.mubr.bf16.mxu0 0
        %1230 = vmatmul.mubr.bf16.gmra.mrb[0].mxu0 %v1192
        %v1231 = vpop.f32.mrb[0].mxu0
        %v1232 = vadd.f32 0.0, %v1231
        %v1233 = vpop.f32.mrb[0].mxu0
        %v1234 = vpop.f32.mrb[0].mxu0
        %v1235 = vpop.f32.mrb[0].mxu0
        %1236 = vdwg.mxu0
        %1238 = vrot.lane.b32.xlu0 %v847, 96
        %v1239 = vpop.permute.xlu0 %1238
        %v1241 = vsel %vm856, %v1088, 0
        %v1244 = vsel %vm1095, %v1239, 0
        %1246 = vmatprep.subr.bf16.mxu0 0
        %1247 = vmatpush1.bf16.msra.mxu0 %v1244
        %1248 = vmatprep.subr.bf16.mxu0 0
        %1249 = vmatpush1.bf16.msra.mxu0 0
        %1250 = vmatprep.subr.bf16.mxu0 0
        %1251 = vmatpush1.bf16.msra.mxu0 0
        %1252 = vmatprep.subr.bf16.mxu0 0
        %1253 = vmatpush1.bf16.msra.mxu0 0
        %1254 = vmatprep.subr.bf16.mxu0 0
        %1255 = vmatpush1.bf16.msra.mxu0 0
        %1256 = vmatprep.subr.bf16.mxu0 0
        %1257 = vmatpush1.bf16.msra.mxu0 0
        %1258 = vmatprep.subr.bf16.mxu0 0
        %1259 = vmatpush1.bf16.msra.mxu0 0
        %1260 = vmatprep.subr.bf16.mxu0 0
        %1261 = vmatpush1.bf16.msra.mxu0 0
        %1262 = vmatprep.subr.bf16.mxu0 0
        %1263 = vmatpush1.bf16.msra.mxu0 0
        %1264 = vmatprep.subr.bf16.mxu0 0
        %1265 = vmatpush1.bf16.msra.mxu0 0
        %1266 = vmatprep.subr.bf16.mxu0 0
        %1267 = vmatpush1.bf16.msra.mxu0 0
        %1268 = vmatprep.subr.bf16.mxu0 0
        %1269 = vmatpush1.bf16.msra.mxu0 0
        %1270 = vmatprep.subr.bf16.mxu0 0
        %1271 = vmatpush1.bf16.msra.mxu0 0
        %1272 = vmatprep.subr.bf16.mxu0 0
        %1273 = vmatpush1.bf16.msra.mxu0 0
        %1274 = vmatprep.subr.bf16.mxu0 0
        %1275 = vmatpush1.bf16.msra.mxu0 0
        %1276 = vmatprep.subr.bf16.mxu0 0
        %1277 = vmatpush1.bf16.msra.mxu0 0
        %1278 = vmatprep.mubr.bf16.mxu0 0
        %1279 = vmatmul.mubr.bf16.gmra.mrb[0].mxu0 %v1241
        %v1280 = vpop.f32.mrb[0].mxu0
        %v1281 = vadd.f32 0.0, %v1280
        %v1282 = vpop.f32.mrb[0].mxu0
        %v1283 = vpop.f32.mrb[0].mxu0
        %v1284 = vpop.f32.mrb[0].mxu0
        %1285 = vdwg.mxu0
        %1287 = vrot.lane.b32.xlu0 %v1183, 8
        %v1288 = vpop.permute.xlu0 %1287
        %1291 = vrot.lane.b32.xlu0 %v1232, 16
        %v1292 = vpop.permute.xlu0 %1291
        %1295 = vrot.lane.b32.xlu0 %v1281, 24
        %v1296 = vpop.permute.xlu0 %1295
        %v1298 = vsel %vm856, %v1134, %v1288
        %vm1299 = vcmask 130048
        %v1300 = vsel %vm1299, %v1298, %v1292
        %vm1301 = vcmask 195584
        %v1302 = vsel %vm1301, %v1300, %v1296
        %v1303 = vpack.c.bf16 %v1302, %v1302
        %v1304 = vld [vmem:[#allocation8] sm:$0xf]
        %v1305 = vld [vmem:[#allocation8 + $0x4] sm:$0xf]
        %v1306 = vld [vmem:[#allocation8 + $0x8] sm:$0xf]
        %v1307 = vld [vmem:[#allocation8 + $0xc] sm:$0xf]
        %v1308 = vld [vmem:[#allocation10] sm:$0x1]
        %v1310 = vlaneseq
        %v1311 = vshrl.u32 %v1310, 7
        %v1312 = vsub.s32 0, %v1311
        %v1313 = vrot.slane %v1308, %v1312
        %v1319 = vunpack.c.l.b16 %v1304
        %v1320 = vunpack.c.l.b16 %v1305
        %v1321 = vunpack.c.l.b16 %v1306
        %v1322 = vunpack.c.l.b16 %v1307
        %v1323 = vpack.c.b16 %v1320, %v1319
        %v1324 = vpack.c.b16 %v1322, %v1321
        %v1328 = vsel %vm709, %v1303, 0
        %1330 = vmatprep.subr.bf16.mxu0 0
        %1331 = vmatpush1.bf16.msra.mxu0 %v1323
        %1332 = vmatprep.subr.bf16.mxu0 0
        %1333 = vmatpush1.bf16.msra.mxu0 %v1324
        %1334 = vmatprep.subr.bf16.mxu0 0
        %1335 = vmatpush1.bf16.msra.mxu0 0
        %1336 = vmatprep.subr.bf16.mxu0 0
        %1337 = vmatpush1.bf16.msra.mxu0 0
        %1338 = vmatprep.subr.bf16.mxu0 0
        %1339 = vmatpush1.bf16.msra.mxu0 0
        %1340 = vmatprep.subr.bf16.mxu0 0
        %1341 = vmatpush1.bf16.msra.mxu0 0
        %1342 = vmatprep.subr.bf16.mxu0 0
        %1343 = vmatpush1.bf16.msra.mxu0 0
        %1344 = vmatprep.subr.bf16.mxu0 0
        %1345 = vmatpush1.bf16.msra.mxu0 0
        %1346 = vmatprep.subr.bf16.mxu0 0
        %1347 = vmatpush1.bf16.msra.mxu0 0
        %1348 = vmatprep.subr.bf16.mxu0 0
        %1349 = vmatpush1.bf16.msra.mxu0 0
        %1350 = vmatprep.subr.bf16.mxu0 0
        %1351 = vmatpush1.bf16.msra.mxu0 0
        %1352 = vmatprep.subr.bf16.mxu0 0
        %1353 = vmatpush1.bf16.msra.mxu0 0
        %1354 = vmatprep.subr.bf16.mxu0 0
        %1355 = vmatpush1.bf16.msra.mxu0 0
        %1356 = vmatprep.subr.bf16.mxu0 0
        %1357 = vmatpush1.bf16.msra.mxu0 0
        %1358 = vmatprep.subr.bf16.mxu0 0
        %1359 = vmatpush1.bf16.msra.mxu0 0
        %1360 = vmatprep.subr.bf16.mxu0 0
        %1361 = vmatpush1.bf16.msra.mxu0 0
        %1362 = vmatprep.mubr.bf16.mxu0 0
        %1363 = vmatmul.mubr.bf16.gmra.mrb[0].mxu0 %v1328
        %v1364 = vpop.f32.mrb[0].mxu0
        %v1365 = vadd.f32 %v1313, %v1364
        %v1366 = vpop.f32.mrb[0].mxu0
        %v1367 = vpop.f32.mrb[0].mxu0
        %v1368 = vpop.f32.mrb[0].mxu0
        %1369 = vdwg.mxu0
        %v1370 = vadd.f32 %v681, %v1365
        %v1371 = vsel %vm709, %v1370, 0.0
        %1372 = vadd.xlane.f32.xlu0 %v1371
        %v1373 = vpop.xlane.xlu0 %1372
        %v1374 = vrcp.pop 32.0
        %v1375 = vmul.f32 %v1373, %v1374
        %v1376 = vsub.f32 %v1370, %v1375
        %v1377 = vmul.f32 %v1376, %v1376
        %v1378 = vsel %vm709, %v1377, 0.0
        %1379 = vadd.xlane.f32.xlu0 %v1378
        %v1380 = vpop.xlane.xlu0 %1379
        %v1381 = vmul.f32 %v1380, %v1374
        %v1382 = vadd.f32 %v1381, 1e-05
        %v1383 = vrsqrt.pop %v1382
        %v1384 = vmul.f32 %v1376, %v1383
        %v1385 = vld [vmem:[#allocation11] sm:$0x1]
        %v1387 = vlaneseq
        %v1388 = vshrl.u32 %v1387, 7
        %v1389 = vsub.s32 0, %v1388
        %v1390 = vrot.slane %v1385, %v1389
        %v1392 = vmul.f32 %v1384, %v1390
        %v1393 = vld [vmem:[%s10] sm:$0x1]
        %v1395 = vlaneseq
        %v1396 = vshrl.u32 %v1395, 7
        %v1397 = vsub.s32 0, %v1396
        %v1398 = vrot.slane %v1393, %v1397
        %v1400 = vadd.f32 %v1392, %v1398
        %v1401 = vpack.c.bf16 %v1400, %v1400
        %v1402 = vld [vmem:[%s11] sm:$0xf]
        %v1403 = vld [vmem:[%s11 + $0x4] sm:$0xf]
        %v1404 = vld [vmem:[%s11 + $0x8] sm:$0xf]
        %v1405 = vld [vmem:[%s11 + $0xc] sm:$0xf]
        %v1406 = vld [vmem:[%s12] sm:$0x1]
        %v1408 = vlaneseq
        %v1409 = vshrl.u32 %v1408, 7
        %v1410 = vsub.s32 0, %v1409
        %v1411 = vrot.slane %v1406, %v1410
        %v1417 = vunpack.c.l.b16 %v1402
        %v1418 = vunpack.c.l.b16 %v1403
        %v1419 = vunpack.c.l.b16 %v1404
        %v1420 = vunpack.c.l.b16 %v1405
        %v1421 = vpack.c.b16 %v1418, %v1417
        %v1422 = vpack.c.b16 %v1420, %v1419
        %v1426 = vsel %vm709, %v1401, 0
        %1428 = vmatprep.subr.bf16.mxu0 0
        %1429 = vmatpush1.bf16.msra.mxu0 %v1421
        %1430 = vmatprep.subr.bf16.mxu0 0
        %1431 = vmatpush1.bf16.msra.mxu0 %v1422
        %1432 = vmatprep.subr.bf16.mxu0 0
        %1433 = vmatpush1.bf16.msra.mxu0 0
        %1434 = vmatprep.subr.bf16.mxu0 0
        %1435 = vmatpush1.bf16.msra.mxu0 0
        %1436 = vmatprep.subr.bf16.mxu0 0
        %1437 = vmatpush1.bf16.msra.mxu0 0
        %1438 = vmatprep.subr.bf16.mxu0 0
        %1439 = vmatpush1.bf16.msra.mxu0 0
        %1440 = vmatprep.subr.bf16.mxu0 0
        %1441 = vmatpush1.bf16.msra.mxu0 0
        %1442 = vmatprep.subr.bf16.mxu0 0
        %1443 = vmatpush1.bf16.msra.mxu0 0
        %1444 = vmatprep.subr.bf16.mxu0 0
        %1445 = vmatpush1.bf16.msra.mxu0 0
        %1446 = vmatprep.subr.bf16.mxu0 0
        %1447 = vmatpush1.bf16.msra.mxu0 0
        %1448 = vmatprep.subr.bf16.mxu0 0
        %1449 = vmatpush1.bf16.msra.mxu0 0
        %1450 = vmatprep.subr.bf16.mxu0 0
        %1451 = vmatpush1.bf16.msra.mxu0 0
        %1452 = vmatprep.subr.bf16.mxu0 0
        %1453 = vmatpush1.bf16.msra.mxu0 0
        %1454 = vmatprep.subr.bf16.mxu0 0
        %1455 = vmatpush1.bf16.msra.mxu0 0
        %1456 = vmatprep.subr.bf16.mxu0 0
        %1457 = vmatpush1.bf16.msra.mxu0 0
        %1458 = vmatprep.subr.bf16.mxu0 0
        %1459 = vmatpush1.bf16.msra.mxu0 0
        %1460 = vmatprep.mubr.bf16.mxu0 0
        %1461 = vmatmul.mubr.bf16.gmra.mrb[0].mxu0 %v1426
        %v1462 = vpop.f32.mrb[0].mxu0
        %v1463 = vadd.f32 %v1411, %v1462
        %v1464 = vpop.f32.mrb[0].mxu0
        %v1465 = vpop.f32.mrb[0].mxu0
        %v1466 = vpop.f32.mrb[0].mxu0
        %1467 = vdwg.mxu0
        %v1468 = vmax.f32 %v1463, 0.0
        %v1469 = vpack.c.bf16 %v1468, %v1468
        %v1470 = vld [vmem:[%s13] sm:$0xf]
        %v1471 = vld [vmem:[%s13 + $0x4] sm:$0xf]
        %v1472 = vld [vmem:[%s13 + $0x8] sm:$0xf]
        %v1473 = vld [vmem:[%s13 + $0xc] sm:$0xf]
        %v1474 = vld [vmem:[%s13 + $0x10] sm:$0xf]
        %v1475 = vld [vmem:[%s13 + $0x14] sm:$0xf]
        %v1476 = vld [vmem:[%s13 + $0x18] sm:$0xf]
        %v1477 = vld [vmem:[%s13 + $0x1c] sm:$0xf]
        %v1478 = vld [vmem:[%s14] sm:$0x1]
        %v1480 = vlaneseq
        %v1481 = vshrl.u32 %v1480, 7
        %v1482 = vsub.s32 0, %v1481
        %v1483 = vrot.slane %v1478, %v1482
        %v1493 = vunpack.c.l.b16 %v1470
        %v1494 = vunpack.c.l.b16 %v1471
        %v1495 = vunpack.c.l.b16 %v1472
        %v1496 = vunpack.c.l.b16 %v1473
        %v1497 = vunpack.c.l.b16 %v1474
        %v1498 = vunpack.c.l.b16 %v1475
        %v1499 = vunpack.c.l.b16 %v1476
        %v1500 = vunpack.c.l.b16 %v1477
        %v1501 = vpack.c.b16 %v1494, %v1493
        %v1502 = vpack.c.b16 %v1496, %v1495
        %v1503 = vpack.c.b16 %v1498, %v1497
        %v1504 = vpack.c.b16 %v1500, %v1499
        %vm1509 = vcmask 523264
        %v1511 = vsel %vm1509, %v1469, 0
        %1513 = vmatprep.subr.bf16.mxu0 0
        %1514 = vmatpush1.bf16.msra.mxu0 %v1501
        %1515 = vmatprep.subr.bf16.mxu0 0
        %1516 = vmatpush1.bf16.msra.mxu0 %v1502
        %1517 = vmatprep.subr.bf16.mxu0 0
        %1518 = vmatpush1.bf16.msra.mxu0 %v1503
        %1519 = vmatprep.subr.bf16.mxu0 0
        %1520 = vmatpush1.bf16.msra.mxu0 %v1504
        %1521 = vmatprep.subr.bf16.mxu0 0
        %1522 = vmatpush1.bf16.msra.mxu0 0
        %1523 = vmatprep.subr.bf16.mxu0 0
        %1524 = vmatpush1.bf16.msra.mxu0 0
        %1525 = vmatprep.subr.bf16.mxu0 0
        %1526 = vmatpush1.bf16.msra.mxu0 0
        %1527 = vmatprep.subr.bf16.mxu0 0
        %1528 = vmatpush1.bf16.msra.mxu0 0
        %1529 = vmatprep.subr.bf16.mxu0 0
        %1530 = vmatpush1.bf16.msra.mxu0 0
        %1531 = vmatprep.subr.bf16.mxu0 0
        %1532 = vmatpush1.bf16.msra.mxu0 0
        %1533 = vmatprep.subr.bf16.mxu0 0
        %1534 = vmatpush1.bf16.msra.mxu0 0
        %1535 = vmatprep.subr.bf16.mxu0 0
        %1536 = vmatpush1.bf16.msra.mxu0 0
        %1537 = vmatprep.subr.bf16.mxu0 0
        %1538 = vmatpush1.bf16.msra.mxu0 0
        %1539 = vmatprep.subr.bf16.mxu0 0
        %1540 = vmatpush1.bf16.msra.mxu0 0
        %1541 = vmatprep.subr.bf16.mxu0 0
        %1542 = vmatpush1.bf16.msra.mxu0 0
        %1543 = vmatprep.subr.bf16.mxu0 0
        %1544 = vmatpush1.bf16.msra.mxu0 0
        %1545 = vmatprep.mubr.bf16.mxu0 0
        %1546 = vmatmul.mubr.bf16.gmra.mrb[0].mxu0 %v1511
        %v1547 = vpop.f32.mrb[0].mxu0
        %v1548 = vadd.f32 %v1483, %v1547
        %v1549 = vpop.f32.mrb[0].mxu0
        %v1550 = vpop.f32.mrb[0].mxu0
        %v1551 = vpop.f32.mrb[0].mxu0
        %1552 = vdwg.mxu0
        %v1553 = vadd.f32 %v1400, %v1548
        %v1554 = vsel %vm709, %v1553, 0.0
        %1555 = vadd.xlane.f32.xlu0 %v1554
        %v1556 = vpop.xlane.xlu0 %1555
        %v1557 = vmul.f32 %v1556, %v1374
        %v1558 = vsub.f32 %v1553, %v1557
        %v1559 = vmul.f32 %v1558, %v1558
        %v1560 = vsel %vm709, %v1559, 0.0
        %1561 = vadd.xlane.f32.xlu0 %v1560
        %v1562 = vpop.xlane.xlu0 %1561
        %v1563 = vmul.f32 %v1562, %v1374
        %v1564 = vadd.f32 %v1563, 1e-05
        %v1565 = vrsqrt.pop %v1564
        %v1566 = vmul.f32 %v1558, %v1565
        %v1567 = vld [vmem:[%s15] sm:$0x1]
        %v1569 = vlaneseq
        %v1570 = vshrl.u32 %v1569, 7
        %v1571 = vsub.s32 0, %v1570
        %v1572 = vrot.slane %v1567, %v1571
        %v1574 = vmul.f32 %v1566, %v1572
        %v1575 = vld [vmem:[%s16] sm:$0x1]
        %v1577 = vlaneseq
        %v1578 = vshrl.u32 %v1577, 7
        %v1579 = vsub.s32 0, %v1578
        %v1580 = vrot.slane %v1575, %v1579
        %v1582 = vadd.f32 %v1574, %v1580
        %1583 = vst.msk [vmem:[%s665] sm:$0xff] %vm709, %v1582
        %s1584 = sand.u32 %s431, 1
        %s1585 = scalar_lea.sflag [#allocation4], %s1584
        %s1586 = sand.u32 %s431, 1
        %s1587 = smul.addr %s1586, 8
        %s1588 = scalar_lea.vmem [#allocation13], %s1587
        // Predicated region
        $region113: #{tpu_custom_call.1} parent=87 // pred_check
          %p1589 = pneg %p441
        $region114: #{tpu_custom_call.1} parent=87 // pred_check_branch
          %1591 = sbr.rel (%p1589) target = $region116
        $region115: #{tpu_custom_call.1} parent=87 // pred_region
          %s1593 = ssub.s32 128, 128
          %1594 = vsyncadd %s1585, %s1593
          %s1595 = sadd.s32 %s40, %s39
          %s1596 = smul.addr %s1595, 128
          %s1597 = scalar_lea.hbm %s17, %s1596
          %s1599 = sshll.u32 %s1588, 4
          %s1600 = int_to_ptr.vmem [resolvable:$true] %s1599
          %1602 = dma.vmem_to_hbm [thread:$0]  %s1600, 128, %s1597, %s1585
        $region116: #{tpu_custom_call.1} parent=87 // pred_fallthru
          _
      $region88: #{tpu_custom_call.1} parent=5 // pred_fallthru
        _
      %p1603 = scmp.le.s32.totalorder 2, %s30
      // Predicated region
      $region117: #{tpu_custom_call.1} parent=5 // pred_check
        %p1604 = pneg %p1603
      $region118: #{tpu_custom_call.1} parent=5 // pred_check_branch
        %1606 = sbr.rel (%p1604) target = $region120
      $region119: #{tpu_custom_call.1} parent=5 // pred_region
        %s1607 = ssub.s32 %s30, 2
        // Predicated region
        $region121: #{tpu_custom_call.1} parent=119 // pred_check
          %p1608 = pneg %p447
        $region122: #{tpu_custom_call.1} parent=119 // pred_check_branch
          %1610 = sbr.rel (%p1608) target = $region124
        $region123: #{tpu_custom_call.1} parent=119 // pred_region
          %s1611 = sand.u32 %s432, 1
          %s1612 = scalar_lea.sflag [#allocation4], %s1611
          %s1613 = sand.u32 %s432, 1
          %s1614 = smul.addr %s1613, 8
          %s1615 = scalar_lea.vmem [#allocation13], %s1614
          %1616 = dma.done %s1612, 128
        $region124: #{tpu_custom_call.1} parent=119 // pred_fallthru
          _
      $region120: #{tpu_custom_call.1} parent=5 // pred_fallthru
        _
    $region6: #{tpu_custom_call.1} parent=1 // loop_footer
      %s34 = sadd.s32 1, %s30
    $region7: #{tpu_custom_call.1} parent=1 // loop_footer_branch
      %29 = sbr.rel target = $region3
    $region8: #{tpu_custom_call.1} parent=1 // loop_exit
      _
    %1617 = vsyncpa [#allocation3], 1
    %s1618 = scalar_lea.sflag [#allocation3], 1
    %1619 = vsyncpa %s1618, 1
    %1620 = vsyncpa [#allocation6], 1
    %1621 = vsyncpa [#allocation9], 1
    %1622 = vsyncpa [#allocation12], 1
    %1623 = vsyncpa [#allocation4], 1
    %s1624 = scalar_lea.sflag [#allocation4], 1
    %1625 = vsyncpa %s1624, 1

</llo_original>
